<compile_context>
chip_gen: v6e
topology: v6e:2x2x1
jax: 0.10.0
libtpu: 0.0.40
codegen_flags: <defaults>
</compile_context>

<pallas_src>
import jax
import jax.numpy as jnp
from jax import lax
from jax.experimental import pallas as pl
from jax.experimental.pallas import tpu as pltpu

# MXU operand dtype. Set to jnp.bfloat16 on v6e/v7x to halve DMA bytes and use
# the native bf16 MXU (bias / relu / log_softmax stay f32). Default f32 keeps
# exact PyTorch semantics and the 1e-4 reference check below.
_MXU_DTYPE = jnp.float32

# Explicit scoped-VMEM budget (well under v7x's 64 MiB physical, leaves 2-deep
# buffering headroom on all generations).
_VMEM_LIMIT = 32 * 1024 * 1024


def _row_tile(m, target=512):
    """Row (sublane) tile: full array if small, else 512 rows (multiple of 8)
    so the grid pipelines HBM->VMEM behind the MXU."""
    return m if m <= target else target


# ----------------------------- Pallas kernels ------------------------------

def _conv_pool_relu_kernel(p00_ref, p01_ref, p10_ref, p11_ref, w_ref, b_ref,
                           o_ref):
    """Fused conv-as-matmul + 2x2 max-pool + relu.

    Each p*_ref holds the im2col patch rows of one corner of every 2x2 pooling
    window; max over the four MXU results == max_pool of the conv output.
    """
    w = w_ref[...].astype(_MXU_DTYPE)

    def mm(p_ref):
        return jnp.dot(p_ref[...].astype(_MXU_DTYPE), w,
                       preferred_element_type=jnp.float32)

    acc = jnp.maximum(jnp.maximum(mm(p00_ref), mm(p01_ref)),
                      jnp.maximum(mm(p10_ref), mm(p11_ref)))
    acc = acc + b_ref[...]                    # bias is constant over the window
    o_ref[...] = jnp.maximum(acc, 0.0).astype(o_ref.dtype)


def _fc_stack_kernel(x_ref, w1_ref, b1_ref, w2_ref, b2_ref, w3_ref, b3_ref,
                     o_ref):
    """fc1+relu -> (dropout id) -> fc2+relu -> (dropout id) -> fc3+log_softmax,
    all in one kernel; intermediates stay in VMEM/vregs."""
    def mm(a, w_ref_):
        return jnp.dot(a.astype(_MXU_DTYPE), w_ref_[...].astype(_MXU_DTYPE),
                       preferred_element_type=jnp.float32)

    h = jnp.maximum(mm(x_ref[...], w1_ref) + b1_ref[...], 0.0)   # (TB, 150)
    h = jnp.maximum(mm(h, w2_ref) + b2_ref[...], 0.0)            # (TB, 50)
    logits = mm(h, w3_ref) + b3_ref[...]                         # (TB, 10)

    m = jnp.max(logits, axis=-1, keepdims=True)
    s = logits - m
    lse = jnp.log(jnp.sum(jnp.exp(s), axis=-1, keepdims=True))
    o_ref[...] = (s - lse).astype(o_ref.dtype)


# ------------------------------ wrappers ------------------------------------

def conv_pool_relu(x, w, b, *, kernel):
    """relu(max_pool2d(conv2d(x), 2)) fused.

    x: (B, H, W, Cin) NHWC.  w: (Kpad, Cout) pre-transposed/padded conv weight
    (rows ordered (kh, kw, cin)).  b: (1, Cout).  Returns (B, OH//2, OW//2, Cout).
    """
    B, H, W, Cin = x.shape
    k = kernel
    Kpad, Cout = w.shape
    OH, OW = H - k + 1, W - k + 1
    assert OH % 2 == 0 and OW % 2 == 0, (OH, OW)
    POH, POW = OH // 2, OW // 2
    KKC = k * k * Cin

    # im2col on the last (lane) axis; feature order (kh, kw, cin) matches the
    # weight prep in prepare_params(). No transposes.
    patches = jnp.concatenate(
        [x[:, dh:dh + OH, dw:dw + OW, :] for dh in range(k) for dw in range(k)],
        axis=-1)                                            # (B, OH, OW, KKC)
    if Kpad != KKC:                                         # ragged-K zero pad
        patches = jnp.pad(patches,
                          ((0, 0), (0, 0), (0, 0), (0, Kpad - KKC)))

    # Four corners of every 2x2 pooling window as row-major patch matrices.
    M = B * POH * POW
    corners = [patches[:, dh::2, dw::2, :].reshape(M, Kpad)
               for dh in (0, 1) for dw in (0, 1)]

    TM = _row_tile(M)
    out = pl.pallas_call(
        _conv_pool_relu_kernel,
        grid=(pl.cdiv(M, TM),),
        in_specs=[pl.BlockSpec((TM, Kpad), lambda i: (i, 0)) for _ in range(4)]
        + [
            pl.BlockSpec((Kpad, Cout), lambda i: (0, 0)),   # weight: VMEM-resident
            pl.BlockSpec((1, Cout), lambda i: (0, 0)),      # bias:   VMEM-resident
        ],
        out_specs=pl.BlockSpec((TM, Cout), lambda i: (i, 0)),
        out_shape=jax.ShapeDtypeStruct((M, Cout), jnp.float32),
        compiler_params=pltpu.CompilerParams(
            dimension_semantics=("parallel",),
            vmem_limit_bytes=_VMEM_LIMIT),
    )(*corners, w, b)
    return out.reshape(B, POH, POW, Cout)


def fc_stack(x, w1, b1, w2, b2, w3, b3):
    """x: (B, 320) -> log-probs (B, 10). One pallas_call for all three FC layers."""
    B, K = x.shape
    N = w3.shape[1]
    TB = _row_tile(B)
    full = lambda i: (0, 0)
    return pl.pallas_call(
        _fc_stack_kernel,
        grid=(pl.cdiv(B, TB),),
        in_specs=[
            pl.BlockSpec((TB, K), lambda i: (i, 0)),
            pl.BlockSpec(w1.shape, full), pl.BlockSpec(b1.shape, full),
            pl.BlockSpec(w2.shape, full), pl.BlockSpec(b2.shape, full),
            pl.BlockSpec(w3.shape, full), pl.BlockSpec(b3.shape, full),
        ],
        out_specs=pl.BlockSpec((TB, N), lambda i: (i, 0)),
        out_shape=jax.ShapeDtypeStruct((B, N), jnp.float32),
        compiler_params=pltpu.CompilerParams(
            dimension_semantics=("parallel",),
            vmem_limit_bytes=_VMEM_LIMIT),
    )(x, w1, b1, w2, b2, w3, b3)


# --------------------------- parameters & forward ---------------------------

def init_torch_params(key):
    """PyTorch-layout parameters, uniform(-1/sqrt(fan_in), 1/sqrt(fan_in))."""
    ks = jax.random.split(key, 10)

    def u(k, shape, fan_in):
        bound = 1.0 / jnp.sqrt(jnp.float32(fan_in))
        return jax.random.uniform(k, shape, jnp.float32, -bound, bound)

    return {
        "conv1_w": u(ks[0], (10, 1, 5, 5), 25),
        "conv1_b": u(ks[1], (10,), 25),
        "conv2_w": u(ks[2], (20, 10, 5, 5), 250),
        "conv2_b": u(ks[3], (20,), 250),
        "fc1_w":   u(ks[4], (150, 320), 320),   # (out, in); in ordered (c, h, w)
        "fc1_b":   u(ks[5], (150,), 320),
        "fc2_w":   u(ks[6], (50, 150), 150),
        "fc2_b":   u(ks[7], (50,), 150),
        "fc3_w":   u(ks[8], (10, 50), 50),
        "fc3_b":   u(ks[9], (10,), 50),
    }


def _conv_w_to_matmul(w, k_pad):
    """(Cout, Cin, kh, kw) -> (k_pad, Cout) matmul weight, rows ordered
    (kh, kw, cin) to match the NHWC im2col, zero-padded to a sublane multiple."""
    cout, cin, kh, kw = w.shape
    w2 = w.transpose(2, 3, 1, 0).reshape(kh * kw * cin, cout)
    return jnp.pad(w2, ((0, k_pad - w2.shape[0]), (0, 0)))


def prepare_params(p):
    """Hoist every per-forward re-layout into a one-time transform."""
    # Permute fc1's 320 input features from PyTorch's (c, h, w) flatten order
    # to our NHWC (h, w, c) flatten order.
    fc1_w_nhwc = (p["fc1_w"].reshape(150, 20, 4, 4)
                  .transpose(0, 2, 3, 1).reshape(150, 320))
    return {
        "conv1_w": _conv_w_to_matmul(p["conv1_w"], 32),    # (32, 10),  K 25->32
        "conv1_b": p["conv1_b"].reshape(1, 10),
        "conv2_w": _conv_w_to_matmul(p["conv2_w"], 256),   # (256, 20), K 250->256
        "conv2_b": p["conv2_b"].reshape(1, 20),
        "fc1_w": fc1_w_nhwc.T,                             # (320, 150)
        "fc1_b": p["fc1_b"].reshape(1, 150),
        "fc2_w": p["fc2_w"].T,                             # (150, 50)
        "fc2_b": p["fc2_b"].reshape(1, 50),
        "fc3_w": p["fc3_w"].T,                             # (50, 10)
        "fc3_b": p["fc3_b"].reshape(1, 10),
    }


def mnist_forward(params, x):
    """x: (B, 1, 28, 28) NCHW float32 (PyTorch layout) -> (B, 10) log-probs."""
    x = jnp.transpose(x, (0, 2, 3, 1))                       # NHWC (C=1: free)
    y = conv_pool_relu(x, params["conv1_w"], params["conv1_b"], kernel=5)
    # Dropout2d(p=0.5): identity at inference.
    y = conv_pool_relu(y, params["conv2_w"], params["conv2_b"], kernel=5)
    B = y.shape[0]
    y = y.reshape(B, -1)        # (B, 320) in (h, w, c) order; fc1_w pre-permuted
    return fc_stack(y, params["fc1_w"], params["fc1_b"],
                    params["fc2_w"], params["fc2_b"],
                    params["fc3_w"], params["fc3_b"])


# ------------------------------ pure-JAX reference ---------------------------

def reference_forward(p, x):
    """Pure-XLA reference mirroring the PyTorch module exactly (NCHW)."""
    def conv(x, w, b):
        y = lax.conv_general_dilated(x, w, (1, 1), "VALID",
                                     dimension_numbers=("NCHW", "OIHW", "NCHW"))
        return y + b.reshape(1, -1, 1, 1)

    def pool_relu(x):
        y = lax.reduce_window(x, -jnp.inf, lax.max,
                              (1, 1, 2, 2), (1, 1, 2, 2), "VALID")
        return jnp.maximum(y, 0.0)

    y = pool_relu(conv(x, p["conv1_w"], p["conv1_b"]))
    y = pool_relu(conv(y, p["conv2_w"], p["conv2_b"]))
    y = y.reshape(y.shape[0], -1)
    y = jnp.maximum(y @ p["fc1_w"].T + p["fc1_b"], 0.0)
    y = jnp.maximum(y @ p["fc2_w"].T + p["fc2_b"], 0.0)
    y = y @ p["fc3_w"].T + p["fc3_b"]
    return jax.nn.log_softmax(y, axis=-1)


if __name__ == "__main__":
    key = jax.random.PRNGKey(0)
    pkey, xkey = jax.random.split(key)
    torch_params = init_torch_params(pkey)
    params = prepare_params(torch_params)
    x = jax.random.normal(xkey, (2, 1, 28, 28), jnp.float32)

    out = jax.block_until_ready(jax.jit(mnist_forward)(params, x))
    ref = jax.block_until_ready(jax.jit(reference_forward)(torch_params, x))

    assert out.shape == (2, 10), out.shape
    # log_softmax rows must exponentiate-sum to 1
    assert bool(jnp.all(jnp.abs(jnp.sum(jnp.exp(out), axis=-1) - 1.0) < 1e-4))
    # Pallas kernels must match the pure-JAX reference of the PyTorch module.
    assert bool(jnp.allclose(out, ref, atol=1e-4, rtol=1e-4)), \
        float(jnp.max(jnp.abs(out - ref)))
    print("KERNEL_OK")
</pallas_src>

<mosaic_0001>
module attributes {stable_mosaic.version = 11 : i64} {
  func.func @_conv_pool_relu_kernel(%arg0: i32, %arg1: memref<288x32xf32, #tpu.memory_space<vmem>>, %arg2: memref<288x32xf32, #tpu.memory_space<vmem>>, %arg3: memref<288x32xf32, #tpu.memory_space<vmem>>, %arg4: memref<288x32xf32, #tpu.memory_space<vmem>>, %arg5: memref<32x10xf32, #tpu.memory_space<vmem>>, %arg6: memref<1x10xf32, #tpu.memory_space<vmem>>, %arg7: memref<288x10xf32, #tpu.memory_space<vmem>>) attributes {dimension_semantics = [#tpu.dimension_semantics<parallel>], iteration_bounds = array<i64: 1>, scalar_prefetch = 0 : i64, scratch_operands = 0 : i64, tpu.core_type = #tpu.core_type<tc>, window_params = [{transform_indices = @transform_0, window_bounds = array<i64: 288, 32>}, {transform_indices = @transform_1, window_bounds = array<i64: 288, 32>}, {transform_indices = @transform_2, window_bounds = array<i64: 288, 32>}, {transform_indices = @transform_3, window_bounds = array<i64: 288, 32>}, {pipeline_mode = #tpu.pipeline_mode<synchronous>, transform_indices = @transform_4, window_bounds = array<i64: 32, 10>}, {pipeline_mode = #tpu.pipeline_mode<synchronous>, transform_indices = @transform_5, window_bounds = array<i64: 1, 10>}, {transform_indices = @transform_6, window_bounds = array<i64: 288, 10>}]} {
    %c0 = arith.constant 0 : index
    %c0_0 = arith.constant 0 : index
    %0 = vector.load %arg5[%c0, %c0_0] : memref<32x10xf32, #tpu.memory_space<vmem>>, vector<32x10xf32>
    %c0_1 = arith.constant 0 : index
    %c0_2 = arith.constant 0 : index
    %1 = vector.load %arg1[%c0_1, %c0_2] : memref<288x32xf32, #tpu.memory_space<vmem>>, vector<288x32xf32>
    %cst = arith.constant dense<0.000000e+00> : vector<288x10xf32>
    %2 = tpu.matmul %1, %0, %cst {dimension_numbers = #tpu.dot_dimension_numbers<[1], [0], [0], [1], [0, 0, 1, 1], [], []>} : vector<288x32xf32>, vector<32x10xf32>, vector<288x10xf32> -> vector<288x10xf32>
    %c0_3 = arith.constant 0 : index
    %c0_4 = arith.constant 0 : index
    %3 = vector.load %arg2[%c0_3, %c0_4] : memref<288x32xf32, #tpu.memory_space<vmem>>, vector<288x32xf32>
    %cst_5 = arith.constant dense<0.000000e+00> : vector<288x10xf32>
    %4 = tpu.matmul %3, %0, %cst_5 {dimension_numbers = #tpu.dot_dimension_numbers<[1], [0], [0], [1], [0, 0, 1, 1], [], []>} : vector<288x32xf32>, vector<32x10xf32>, vector<288x10xf32> -> vector<288x10xf32>
    %5 = arith.maximumf %2, %4 : vector<288x10xf32>
    %c0_6 = arith.constant 0 : index
    %c0_7 = arith.constant 0 : index
    %6 = vector.load %arg3[%c0_6, %c0_7] : memref<288x32xf32, #tpu.memory_space<vmem>>, vector<288x32xf32>
    %cst_8 = arith.constant dense<0.000000e+00> : vector<288x10xf32>
    %7 = tpu.matmul %6, %0, %cst_8 {dimension_numbers = #tpu.dot_dimension_numbers<[1], [0], [0], [1], [0, 0, 1, 1], [], []>} : vector<288x32xf32>, vector<32x10xf32>, vector<288x10xf32> -> vector<288x10xf32>
    %c0_9 = arith.constant 0 : index
    %c0_10 = arith.constant 0 : index
    %8 = vector.load %arg4[%c0_9, %c0_10] : memref<288x32xf32, #tpu.memory_space<vmem>>, vector<288x32xf32>
    %cst_11 = arith.constant dense<0.000000e+00> : vector<288x10xf32>
    %9 = tpu.matmul %8, %0, %cst_11 {dimension_numbers = #tpu.dot_dimension_numbers<[1], [0], [0], [1], [0, 0, 1, 1], [], []>} : vector<288x32xf32>, vector<32x10xf32>, vector<288x10xf32> -> vector<288x10xf32>
    %10 = arith.maximumf %7, %9 : vector<288x10xf32>
    %11 = arith.maximumf %5, %10 : vector<288x10xf32>
    %c0_12 = arith.constant 0 : index
    %c0_13 = arith.constant 0 : index
    %12 = vector.load %arg6[%c0_12, %c0_13] : memref<1x10xf32, #tpu.memory_space<vmem>>, vector<1x10xf32>
    %13 = vector.broadcast %12 : vector<1x10xf32> to vector<288x10xf32>
    %14 = arith.addf %11, %13 : vector<288x10xf32>
    %cst_14 = arith.constant 0.000000e+00 : f32
    %15 = vector.broadcast %cst_14 : f32 to vector<288x10xf32>
    %16 = arith.maximumf %14, %15 : vector<288x10xf32>
    %c0_15 = arith.constant 0 : index
    %c0_16 = arith.constant 0 : index
    %17 = vector.load %arg7[%c0_15, %c0_16] : memref<288x10xf32, #tpu.memory_space<vmem>>, vector<288x10xf32>
    tpu.vector_store %arg7[%c0_15, %c0_16], %16 {strides = array<i32>} : memref<288x10xf32, #tpu.memory_space<vmem>>, vector<288x10xf32>,
    return
  }
  func.func @transform_0(%arg0: i32) -> (i32, i32) {
    %c0_i32 = arith.constant 0 : i32
    %c0_i32_0 = arith.constant 0 : i32
    return %arg0, %c0_i32 : i32, i32
  }
  func.func @transform_1(%arg0: i32) -> (i32, i32) {
    %c0_i32 = arith.constant 0 : i32
    %c0_i32_0 = arith.constant 0 : i32
    return %arg0, %c0_i32 : i32, i32
  }
  func.func @transform_2(%arg0: i32) -> (i32, i32) {
    %c0_i32 = arith.constant 0 : i32
    %c0_i32_0 = arith.constant 0 : i32
    return %arg0, %c0_i32 : i32, i32
  }
  func.func @transform_3(%arg0: i32) -> (i32, i32) {
    %c0_i32 = arith.constant 0 : i32
    %c0_i32_0 = arith.constant 0 : i32
    return %arg0, %c0_i32 : i32, i32
  }
  func.func @transform_4(%arg0: i32) -> (i32, i32) {
    %c0_i32 = arith.constant 0 : i32
    %c0_i32_0 = arith.constant 0 : i32
    %c0_i32_1 = arith.constant 0 : i32
    return %c0_i32, %c0_i32_0 : i32, i32
  }
  func.func @transform_5(%arg0: i32) -> (i32, i32) {
    %c0_i32 = arith.constant 0 : i32
    %c0_i32_0 = arith.constant 0 : i32
    %c0_i32_1 = arith.constant 0 : i32
    return %c0_i32, %c0_i32_0 : i32, i32
  }
  func.func @transform_6(%arg0: i32) -> (i32, i32) {
    %c0_i32 = arith.constant 0 : i32
    %c0_i32_0 = arith.constant 0 : i32
    return %arg0, %c0_i32 : i32, i32
  }
}

module attributes {stable_mosaic.version = 11 : i64} {
  func.func @_conv_pool_relu_kernel(%arg0: i32, %arg1: memref<32x256xf32, #tpu.memory_space<vmem>>, %arg2: memref<32x256xf32, #tpu.memory_space<vmem>>, %arg3: memref<32x256xf32, #tpu.memory_space<vmem>>, %arg4: memref<32x256xf32, #tpu.memory_space<vmem>>, %arg5: memref<256x20xf32, #tpu.memory_space<vmem>>, %arg6: memref<1x20xf32, #tpu.memory_space<vmem>>, %arg7: memref<32x20xf32, #tpu.memory_space<vmem>>) attributes {dimension_semantics = [#tpu.dimension_semantics<parallel>], iteration_bounds = array<i64: 1>, scalar_prefetch = 0 : i64, scratch_operands = 0 : i64, tpu.core_type = #tpu.core_type<tc>, window_params = [{transform_indices = @transform_0, window_bounds = array<i64: 32, 256>}, {transform_indices = @transform_1, window_bounds = array<i64: 32, 256>}, {transform_indices = @transform_2, window_bounds = array<i64: 32, 256>}, {transform_indices = @transform_3, window_bounds = array<i64: 32, 256>}, {pipeline_mode = #tpu.pipeline_mode<synchronous>, transform_indices = @transform_4, window_bounds = array<i64: 256, 20>}, {pipeline_mode = #tpu.pipeline_mode<synchronous>, transform_indices = @transform_5, window_bounds = array<i64: 1, 20>}, {transform_indices = @transform_6, window_bounds = array<i64: 32, 20>}]} {
    %c0 = arith.constant 0 : index
    %c0_0 = arith.constant 0 : index
    %0 = vector.load %arg5[%c0, %c0_0] : memref<256x20xf32, #tpu.memory_space<vmem>>, vector<256x20xf32>
    %c0_1 = arith.constant 0 : index
    %c0_2 = arith.constant 0 : index
    %1 = vector.load %arg1[%c0_1, %c0_2] : memref<32x256xf32, #tpu.memory_space<vmem>>, vector<32x256xf32>
    %cst = arith.constant dense<0.000000e+00> : vector<32x20xf32>
    %2 = tpu.matmul %1, %0, %cst {dimension_numbers = #tpu.dot_dimension_numbers<[1], [0], [0], [1], [0, 0, 1, 1], [], []>} : vector<32x256xf32>, vector<256x20xf32>, vector<32x20xf32> -> vector<32x20xf32>
    %c0_3 = arith.constant 0 : index
    %c0_4 = arith.constant 0 : index
    %3 = vector.load %arg2[%c0_3, %c0_4] : memref<32x256xf32, #tpu.memory_space<vmem>>, vector<32x256xf32>
    %cst_5 = arith.constant dense<0.000000e+00> : vector<32x20xf32>
    %4 = tpu.matmul %3, %0, %cst_5 {dimension_numbers = #tpu.dot_dimension_numbers<[1], [0], [0], [1], [0, 0, 1, 1], [], []>} : vector<32x256xf32>, vector<256x20xf32>, vector<32x20xf32> -> vector<32x20xf32>
    %5 = arith.maximumf %2, %4 : vector<32x20xf32>
    %c0_6 = arith.constant 0 : index
    %c0_7 = arith.constant 0 : index
    %6 = vector.load %arg3[%c0_6, %c0_7] : memref<32x256xf32, #tpu.memory_space<vmem>>, vector<32x256xf32>
    %cst_8 = arith.constant dense<0.000000e+00> : vector<32x20xf32>
    %7 = tpu.matmul %6, %0, %cst_8 {dimension_numbers = #tpu.dot_dimension_numbers<[1], [0], [0], [1], [0, 0, 1, 1], [], []>} : vector<32x256xf32>, vector<256x20xf32>, vector<32x20xf32> -> vector<32x20xf32>
    %c0_9 = arith.constant 0 : index
    %c0_10 = arith.constant 0 : index
    %8 = vector.load %arg4[%c0_9, %c0_10] : memref<32x256xf32, #tpu.memory_space<vmem>>, vector<32x256xf32>
    %cst_11 = arith.constant dense<0.000000e+00> : vector<32x20xf32>
    %9 = tpu.matmul %8, %0, %cst_11 {dimension_numbers = #tpu.dot_dimension_numbers<[1], [0], [0], [1], [0, 0, 1, 1], [], []>} : vector<32x256xf32>, vector<256x20xf32>, vector<32x20xf32> -> vector<32x20xf32>
    %10 = arith.maximumf %7, %9 : vector<32x20xf32>
    %11 = arith.maximumf %5, %10 : vector<32x20xf32>
    %c0_12 = arith.constant 0 : index
    %c0_13 = arith.constant 0 : index
    %12 = vector.load %arg6[%c0_12, %c0_13] : memref<1x20xf32, #tpu.memory_space<vmem>>, vector<1x20xf32>
    %13 = vector.broadcast %12 : vector<1x20xf32> to vector<32x20xf32>
    %14 = arith.addf %11, %13 : vector<32x20xf32>
    %cst_14 = arith.constant 0.000000e+00 : f32
    %15 = vector.broadcast %cst_14 : f32 to vector<32x20xf32>
    %16 = arith.maximumf %14, %15 : vector<32x20xf32>
    %c0_15 = arith.constant 0 : index
    %c0_16 = arith.constant 0 : index
    %17 = vector.load %arg7[%c0_15, %c0_16] : memref<32x20xf32, #tpu.memory_space<vmem>>, vector<32x20xf32>
    tpu.vector_store %arg7[%c0_15, %c0_16], %16 {strides = array<i32>} : memref<32x20xf32, #tpu.memory_space<vmem>>, vector<32x20xf32>,
    return
  }
  func.func @transform_0(%arg0: i32) -> (i32, i32) {
    %c0_i32 = arith.constant 0 : i32
    %c0_i32_0 = arith.constant 0 : i32
    return %arg0, %c0_i32 : i32, i32
  }
  func.func @transform_1(%arg0: i32) -> (i32, i32) {
    %c0_i32 = arith.constant 0 : i32
    %c0_i32_0 = arith.constant 0 : i32
    return %arg0, %c0_i32 : i32, i32
  }
  func.func @transform_2(%arg0: i32) -> (i32, i32) {
    %c0_i32 = arith.constant 0 : i32
    %c0_i32_0 = arith.constant 0 : i32
    return %arg0, %c0_i32 : i32, i32
  }
  func.func @transform_3(%arg0: i32) -> (i32, i32) {
    %c0_i32 = arith.constant 0 : i32
    %c0_i32_0 = arith.constant 0 : i32
    return %arg0, %c0_i32 : i32, i32
  }
  func.func @transform_4(%arg0: i32) -> (i32, i32) {
    %c0_i32 = arith.constant 0 : i32
    %c0_i32_0 = arith.constant 0 : i32
    %c0_i32_1 = arith.constant 0 : i32
    return %c0_i32, %c0_i32_0 : i32, i32
  }
  func.func @transform_5(%arg0: i32) -> (i32, i32) {
    %c0_i32 = arith.constant 0 : i32
    %c0_i32_0 = arith.constant 0 : i32
    %c0_i32_1 = arith.constant 0 : i32
    return %c0_i32, %c0_i32_0 : i32, i32
  }
  func.func @transform_6(%arg0: i32) -> (i32, i32) {
    %c0_i32 = arith.constant 0 : i32
    %c0_i32_0 = arith.constant 0 : i32
    return %arg0, %c0_i32 : i32, i32
  }
}

module attributes {stable_mosaic.version = 11 : i64} {
  func.func @_fc_stack_kernel(%arg0: i32, %arg1: memref<2x320xf32, #tpu.memory_space<vmem>>, %arg2: memref<320x150xf32, #tpu.memory_space<vmem>>, %arg3: memref<1x150xf32, #tpu.memory_space<vmem>>, %arg4: memref<150x50xf32, #tpu.memory_space<vmem>>, %arg5: memref<1x50xf32, #tpu.memory_space<vmem>>, %arg6: memref<50x10xf32, #tpu.memory_space<vmem>>, %arg7: memref<1x10xf32, #tpu.memory_space<vmem>>, %arg8: memref<2x10xf32, #tpu.memory_space<vmem>>) attributes {dimension_semantics = [#tpu.dimension_semantics<parallel>], iteration_bounds = array<i64: 1>, scalar_prefetch = 0 : i64, scratch_operands = 0 : i64, tpu.core_type = #tpu.core_type<tc>, window_params = [{transform_indices = @transform_0, window_bounds = array<i64: 2, 320>}, {pipeline_mode = #tpu.pipeline_mode<synchronous>, transform_indices = @transform_1, window_bounds = array<i64: 320, 150>}, {pipeline_mode = #tpu.pipeline_mode<synchronous>, transform_indices = @transform_2, window_bounds = array<i64: 1, 150>}, {pipeline_mode = #tpu.pipeline_mode<synchronous>, transform_indices = @transform_3, window_bounds = array<i64: 150, 50>}, {pipeline_mode = #tpu.pipeline_mode<synchronous>, transform_indices = @transform_4, window_bounds = array<i64: 1, 50>}, {pipeline_mode = #tpu.pipeline_mode<synchronous>, transform_indices = @transform_5, window_bounds = array<i64: 50, 10>}, {pipeline_mode = #tpu.pipeline_mode<synchronous>, transform_indices = @transform_6, window_bounds = array<i64: 1, 10>}, {transform_indices = @transform_7, window_bounds = array<i64: 2, 10>}]} {
    %c0 = arith.constant 0 : index
    %c0_0 = arith.constant 0 : index
    %0 = vector.load %arg1[%c0, %c0_0] : memref<2x320xf32, #tpu.memory_space<vmem>>, vector<2x320xf32>
    %c0_1 = arith.constant 0 : index
    %c0_2 = arith.constant 0 : index
    %1 = vector.load %arg2[%c0_1, %c0_2] : memref<320x150xf32, #tpu.memory_space<vmem>>, vector<320x150xf32>
    %cst = arith.constant dense<0.000000e+00> : vector<2x150xf32>
    %2 = tpu.matmul %0, %1, %cst {dimension_numbers = #tpu.dot_dimension_numbers<[1], [0], [0], [1], [0, 0, 1, 1], [], []>} : vector<2x320xf32>, vector<320x150xf32>, vector<2x150xf32> -> vector<2x150xf32>
    %c0_3 = arith.constant 0 : index
    %c0_4 = arith.constant 0 : index
    %3 = vector.load %arg3[%c0_3, %c0_4] : memref<1x150xf32, #tpu.memory_space<vmem>>, vector<1x150xf32>
    %4 = vector.broadcast %3 : vector<1x150xf32> to vector<2x150xf32>
    %5 = arith.addf %2, %4 : vector<2x150xf32>
    %cst_5 = arith.constant 0.000000e+00 : f32
    %6 = vector.broadcast %cst_5 : f32 to vector<2x150xf32>
    %7 = arith.maximumf %5, %6 : vector<2x150xf32>
    %c0_6 = arith.constant 0 : index
    %c0_7 = arith.constant 0 : index
    %8 = vector.load %arg4[%c0_6, %c0_7] : memref<150x50xf32, #tpu.memory_space<vmem>>, vector<150x50xf32>
    %cst_8 = arith.constant dense<0.000000e+00> : vector<2x50xf32>
    %9 = tpu.matmul %7, %8, %cst_8 {dimension_numbers = #tpu.dot_dimension_numbers<[1], [0], [0], [1], [0, 0, 1, 1], [], []>} : vector<2x150xf32>, vector<150x50xf32>, vector<2x50xf32> -> vector<2x50xf32>
    %c0_9 = arith.constant 0 : index
    %c0_10 = arith.constant 0 : index
    %10 = vector.load %arg5[%c0_9, %c0_10] : memref<1x50xf32, #tpu.memory_space<vmem>>, vector<1x50xf32>
    %11 = vector.broadcast %10 : vector<1x50xf32> to vector<2x50xf32>
    %12 = arith.addf %9, %11 : vector<2x50xf32>
    %cst_11 = arith.constant 0.000000e+00 : f32
    %13 = vector.broadcast %cst_11 : f32 to vector<2x50xf32>
    %14 = arith.maximumf %12, %13 : vector<2x50xf32>
    %c0_12 = arith.constant 0 : index
    %c0_13 = arith.constant 0 : index
    %15 = vector.load %arg6[%c0_12, %c0_13] : memref<50x10xf32, #tpu.memory_space<vmem>>, vector<50x10xf32>
    %cst_14 = arith.constant dense<0.000000e+00> : vector<2x10xf32>
    %16 = tpu.matmul %14, %15, %cst_14 {dimension_numbers = #tpu.dot_dimension_numbers<[1], [0], [0], [1], [0, 0, 1, 1], [], []>} : vector<2x50xf32>, vector<50x10xf32>, vector<2x10xf32> -> vector<2x10xf32>
    %c0_15 = arith.constant 0 : index
    %c0_16 = arith.constant 0 : index
    %17 = vector.load %arg7[%c0_15, %c0_16] : memref<1x10xf32, #tpu.memory_space<vmem>>, vector<1x10xf32>
    %18 = vector.broadcast %17 : vector<1x10xf32> to vector<2x10xf32>
    %19 = arith.addf %16, %18 : vector<2x10xf32>
    %cst_17 = arith.constant dense<0xFF800000> : vector<2xf32>
    %20 = vector.multi_reduction <maximumf>, %19, %cst_17 [1] : vector<2x10xf32> to vector<2xf32>
    %21 = vector.shape_cast %20 : vector<2xf32> to vector<2x1xf32>
    %22 = vector.broadcast %21 : vector<2x1xf32> to vector<2x10xf32>
    %23 = arith.subf %19, %22 : vector<2x10xf32>
    %24 = math.exp %23 : vector<2x10xf32>
    %cst_18 = arith.constant dense<0.000000e+00> : vector<2xf32>
    %25 = vector.multi_reduction <add>, %24, %cst_18 [1] : vector<2x10xf32> to vector<2xf32>
    %26 = vector.shape_cast %25 : vector<2xf32> to vector<2x1xf32>
    %27 = math.log %26 : vector<2x1xf32>
    %28 = vector.broadcast %27 : vector<2x1xf32> to vector<2x10xf32>
    %29 = arith.subf %23, %28 : vector<2x10xf32>
    %c0_19 = arith.constant 0 : index
    %c0_20 = arith.constant 0 : index
    %30 = vector.load %arg8[%c0_19, %c0_20] : memref<2x10xf32, #tpu.memory_space<vmem>>, vector<2x10xf32>
    tpu.vector_store %arg8[%c0_19, %c0_20], %29 {strides = array<i32>} : memref<2x10xf32, #tpu.memory_space<vmem>>, vector<2x10xf32>,
    return
  }
  func.func @transform_0(%arg0: i32) -> (i32, i32) {
    %c0_i32 = arith.constant 0 : i32
    %c0_i32_0 = arith.constant 0 : i32
    return %arg0, %c0_i32 : i32, i32
  }
  func.func @transform_1(%arg0: i32) -> (i32, i32) {
    %c0_i32 = arith.constant 0 : i32
    %c0_i32_0 = arith.constant 0 : i32
    %c0_i32_1 = arith.constant 0 : i32
    return %c0_i32, %c0_i32_0 : i32, i32
  }
  func.func @transform_2(%arg0: i32) -> (i32, i32) {
    %c0_i32 = arith.constant 0 : i32
    %c0_i32_0 = arith.constant 0 : i32
    %c0_i32_1 = arith.constant 0 : i32
    return %c0_i32, %c0_i32_0 : i32, i32
  }
  func.func @transform_3(%arg0: i32) -> (i32, i32) {
    %c0_i32 = arith.constant 0 : i32
    %c0_i32_0 = arith.constant 0 : i32
    %c0_i32_1 = arith.constant 0 : i32
    return %c0_i32, %c0_i32_0 : i32, i32
  }
  func.func @transform_4(%arg0: i32) -> (i32, i32) {
    %c0_i32 = arith.constant 0 : i32
    %c0_i32_0 = arith.constant 0 : i32
    %c0_i32_1 = arith.constant 0 : i32
    return %c0_i32, %c0_i32_0 : i32, i32
  }
  func.func @transform_5(%arg0: i32) -> (i32, i32) {
    %c0_i32 = arith.constant 0 : i32
    %c0_i32_0 = arith.constant 0 : i32
    %c0_i32_1 = arith.constant 0 : i32
    return %c0_i32, %c0_i32_0 : i32, i32
  }
  func.func @transform_6(%arg0: i32) -> (i32, i32) {
    %c0_i32 = arith.constant 0 : i32
    %c0_i32_0 = arith.constant 0 : i32
    %c0_i32_1 = arith.constant 0 : i32
    return %c0_i32, %c0_i32_0 : i32, i32
  }
  func.func @transform_7(%arg0: i32) -> (i32, i32) {
    %c0_i32 = arith.constant 0 : i32
    %c0_i32_0 = arith.constant 0 : i32
    return %arg0, %c0_i32 : i32, i32
  }
}

</mosaic_0001>

<llo_original>
// kernel: mnist_forward.3
$region0: #{mnist_forward.3}
  #allocation0 [shape = 'u32[]', space=smem, size = 0x4, offset = 0x4, fixed_abs, tag = 'smem constant byte address 0x4 - core index']
  #allocation1 [shape = 'u32[144,128]{1,0:T(1,128)}', space=vmem, size = 0x12000, scoped, tag = 'internal scratch']
  %s0 = inlined_call_operand.vmem [shape: f32[288,32], index: 0, kind: input, shape index: {}]
  %s1 = inlined_call_operand.vmem [shape: f32[288,32], index: 1, kind: input, shape index: {}]
  %s2 = inlined_call_operand.vmem [shape: f32[288,32], index: 2, kind: input, shape index: {}]
  %s3 = inlined_call_operand.vmem [shape: f32[288,32], index: 3, kind: input, shape index: {}]
  %s4 = inlined_call_operand.vmem [shape: f32[32,10], index: 4, kind: input, shape index: {}]
  %s5 = inlined_call_operand.vmem [shape: f32[1,10], index: 5, kind: input, shape index: {}]
  %s6 = inlined_call_operand.vmem [shape: f32[288,10], index: 6, kind: output, shape index: {}]
  %s7 = sld [smem:[#allocation0]]
  $region34: #{mnist_forward.3} parent=0
    _
  %s9 = ssub.s32 1, %s7
  %s10 = scalar_select 0, %s9, %s7
  // Predicated region
  $region2: #{mnist_forward.3} parent=0 // pred_check
    _
  $region3: #{mnist_forward.3} parent=0 // pred_check_branch
    %12 = sbr.rel (0) target = $region5
  $region4: #{mnist_forward.3} parent=0 // pred_region
    _
  $region5: #{mnist_forward.3} parent=0 // pred_fallthru
    _
  // Predicated region
  $region6: #{mnist_forward.3} parent=0 // pred_check
    _
  $region7: #{mnist_forward.3} parent=0 // pred_check_branch
    %14 = sbr.rel (0) target = $region9
  $region8: #{mnist_forward.3} parent=0 // pred_region
    _
  $region9: #{mnist_forward.3} parent=0 // pred_fallthru
    _
  // Predicated region
  $region10: #{mnist_forward.3} parent=0 // pred_check
    _
  $region11: #{mnist_forward.3} parent=0 // pred_check_branch
    %16 = sbr.rel (0) target = $region13
  $region12: #{mnist_forward.3} parent=0 // pred_region
    _
  $region13: #{mnist_forward.3} parent=0 // pred_fallthru
    _
  // Predicated region
  $region14: #{mnist_forward.3} parent=0 // pred_check
    _
  $region15: #{mnist_forward.3} parent=0 // pred_check_branch
    %18 = sbr.rel (0) target = $region17
  $region16: #{mnist_forward.3} parent=0 // pred_region
    _
  $region17: #{mnist_forward.3} parent=0 // pred_fallthru
    _
  // Predicated region
  $region18: #{mnist_forward.3} parent=0 // pred_check
    _
  $region19: #{mnist_forward.3} parent=0 // pred_check_branch
    %20 = sbr.rel (0) target = $region21
  $region20: #{mnist_forward.3} parent=0 // pred_region
    _
  $region21: #{mnist_forward.3} parent=0 // pred_fallthru
    _
  // Predicated region
  $region22: #{mnist_forward.3} parent=0 // pred_check
    _
  $region23: #{mnist_forward.3} parent=0 // pred_check_branch
    %22 = sbr.rel (0) target = $region25
  $region24: #{mnist_forward.3} parent=0 // pred_region
    _
  $region25: #{mnist_forward.3} parent=0 // pred_fallthru
    _
  %v23 = vld [vmem:[%s4] sm:$0xff]
  %v24 = vld [vmem:[%s4 + $0x8] sm:$0xff]
  %v25 = vld [vmem:[%s4 + $0x10] sm:$0xff]
  %v26 = vld [vmem:[%s4 + $0x18] sm:$0xff]
  %v27 = vld [vmem:[%s0] sm:$0xff]
  %v28 = vld [vmem:[%s0 + $0x8] sm:$0xff]
  %v29 = vld [vmem:[%s0 + $0x10] sm:$0xff]
  %v30 = vld [vmem:[%s0 + $0x18] sm:$0xff]
  %v31 = vld [vmem:[%s0 + $0x20] sm:$0xff]
  %v32 = vld [vmem:[%s0 + $0x28] sm:$0xff]
  %v33 = vld [vmem:[%s0 + $0x30] sm:$0xff]
  %v34 = vld [vmem:[%s0 + $0x38] sm:$0xff]
  %v35 = vld [vmem:[%s0 + $0x40] sm:$0xff]
  %v36 = vld [vmem:[%s0 + $0x48] sm:$0xff]
  %v37 = vld [vmem:[%s0 + $0x50] sm:$0xff]
  %v38 = vld [vmem:[%s0 + $0x58] sm:$0xff]
  %v39 = vld [vmem:[%s0 + $0x60] sm:$0xff]
  %v40 = vld [vmem:[%s0 + $0x68] sm:$0xff]
  %v41 = vld [vmem:[%s0 + $0x70] sm:$0xff]
  %v42 = vld [vmem:[%s0 + $0x78] sm:$0xff]
  %v43 = vld [vmem:[%s0 + $0x80] sm:$0xff]
  %v44 = vld [vmem:[%s0 + $0x88] sm:$0xff]
  %v45 = vld [vmem:[%s0 + $0x90] sm:$0xff]
  %v46 = vld [vmem:[%s0 + $0x98] sm:$0xff]
  %v47 = vld [vmem:[%s0 + $0xa0] sm:$0xff]
  %v48 = vld [vmem:[%s0 + $0xa8] sm:$0xff]
  %v49 = vld [vmem:[%s0 + $0xb0] sm:$0xff]
  %v50 = vld [vmem:[%s0 + $0xb8] sm:$0xff]
  %v51 = vld [vmem:[%s0 + $0xc0] sm:$0xff]
  %v52 = vld [vmem:[%s0 + $0xc8] sm:$0xff]
  %v53 = vld [vmem:[%s0 + $0xd0] sm:$0xff]
  %v54 = vld [vmem:[%s0 + $0xd8] sm:$0xff]
  %v55 = vld [vmem:[%s0 + $0xe0] sm:$0xff]
  %v56 = vld [vmem:[%s0 + $0xe8] sm:$0xff]
  %v57 = vld [vmem:[%s0 + $0xf0] sm:$0xff]
  %v58 = vld [vmem:[%s0 + $0xf8] sm:$0xff]
  %v59 = vld [vmem:[%s0 + $0x100] sm:$0xff]
  %v60 = vld [vmem:[%s0 + $0x108] sm:$0xff]
  %v61 = vld [vmem:[%s0 + $0x110] sm:$0xff]
  %v62 = vld [vmem:[%s0 + $0x118] sm:$0xff]
  %vm63 = vcmask 261120
  %v65 = vsel %vm63, %v27, 0
  %v68 = vsel %vm63, %v28, 0
  %v71 = vsel %vm63, %v29, 0
  %v74 = vsel %vm63, %v30, 0
  %v77 = vsel %vm63, %v31, 0
  %v80 = vsel %vm63, %v32, 0
  %v83 = vsel %vm63, %v33, 0
  %v86 = vsel %vm63, %v34, 0
  %v89 = vsel %vm63, %v35, 0
  %v92 = vsel %vm63, %v36, 0
  %v95 = vsel %vm63, %v37, 0
  %v98 = vsel %vm63, %v38, 0
  %v101 = vsel %vm63, %v39, 0
  %v104 = vsel %vm63, %v40, 0
  %v107 = vsel %vm63, %v41, 0
  %v110 = vsel %vm63, %v42, 0
  %v113 = vsel %vm63, %v43, 0
  %v116 = vsel %vm63, %v44, 0
  %v119 = vsel %vm63, %v45, 0
  %v122 = vsel %vm63, %v46, 0
  %v125 = vsel %vm63, %v47, 0
  %v128 = vsel %vm63, %v48, 0
  %v131 = vsel %vm63, %v49, 0
  %v134 = vsel %vm63, %v50, 0
  %v137 = vsel %vm63, %v51, 0
  %v140 = vsel %vm63, %v52, 0
  %v143 = vsel %vm63, %v53, 0
  %v146 = vsel %vm63, %v54, 0
  %v149 = vsel %vm63, %v55, 0
  %v152 = vsel %vm63, %v56, 0
  %v155 = vsel %vm63, %v57, 0
  %v158 = vsel %vm63, %v58, 0
  %v161 = vsel %vm63, %v59, 0
  %v164 = vsel %vm63, %v60, 0
  %v167 = vsel %vm63, %v61, 0
  %v170 = vsel %vm63, %v62, 0
  %172 = vmatprep.subr.mxu0 0.0
  %173 = vmatpush1.msra.mxu0 0.0
  %174 = vmatprep.subr.mxu0 0.0
  %175 = vmatpush1.msra.mxu0 0.0
  %176 = vmatprep.subr.mxu0 0.0
  %177 = vmatpush1.msra.mxu0 0.0
  %178 = vmatprep.subr.mxu0 0.0
  %179 = vmatpush1.msra.mxu0 0.0
  %180 = vmatprep.subr.mxu0 0.0
  %181 = vmatpush1.msra.mxu0 0.0
  %182 = vmatprep.subr.mxu0 0.0
  %183 = vmatpush1.msra.mxu0 0.0
  %184 = vmatprep.subr.mxu0 0.0
  %185 = vmatpush1.msra.mxu0 0.0
  %186 = vmatprep.subr.mxu0 0.0
  %187 = vmatpush1.msra.mxu0 0.0
  %188 = vmatprep.subr.mxu0 0.0
  %189 = vmatpush1.msra.mxu0 0.0
  %190 = vmatprep.subr.mxu0 0.0
  %191 = vmatpush1.msra.mxu0 0.0
  %192 = vmatprep.subr.mxu0 0.0
  %193 = vmatpush1.msra.mxu0 0.0
  %194 = vmatprep.subr.mxu0 0.0
  %195 = vmatpush1.msra.mxu0 0.0
  %196 = vmatprep.subr.mxu0 0.0
  %197 = vmatpush1.msra.mxu0 %v26
  %198 = vmatprep.subr.mxu0 0.0
  %199 = vmatpush1.msra.mxu0 %v25
  %200 = vmatprep.subr.mxu0 0.0
  %201 = vmatpush1.msra.mxu0 %v24
  %202 = vmatprep.subr.mxu0 0.0
  %203 = vmatpush1.msra.mxu0 %v23
  %204 = vmatprep.subr.mxu0 0.0
  %205 = vmatpush2.msra.mxu0 0.0
  %206 = vmatprep.subr.mxu0 0.0
  %207 = vmatpush2.msra.mxu0 0.0
  %208 = vmatprep.subr.mxu0 0.0
  %209 = vmatpush2.msra.mxu0 0.0
  %210 = vmatprep.subr.mxu0 0.0
  %211 = vmatpush2.msra.mxu0 0.0
  %212 = vmatprep.subr.mxu0 0.0
  %213 = vmatpush2.msra.mxu0 0.0
  %214 = vmatprep.subr.mxu0 0.0
  %215 = vmatpush2.msra.mxu0 0.0
  %216 = vmatprep.subr.mxu0 0.0
  %217 = vmatpush2.msra.mxu0 0.0
  %218 = vmatprep.subr.mxu0 0.0
  %219 = vmatpush2.msra.mxu0 0.0
  %220 = vmatprep.subr.mxu0 0.0
  %221 = vmatpush2.msra.mxu0 0.0
  %222 = vmatprep.subr.mxu0 0.0
  %223 = vmatpush2.msra.mxu0 0.0
  %224 = vmatprep.subr.mxu0 0.0
  %225 = vmatpush2.msra.mxu0 0.0
  %226 = vmatprep.subr.mxu0 0.0
  %227 = vmatpush2.msra.mxu0 0.0
  %228 = vmatprep.subr.mxu0 0.0
  %229 = vmatpush2.msra.mxu0 0.0
  %230 = vmatprep.subr.mxu0 0.0
  %231 = vmatpush2.msra.mxu0 0.0
  %232 = vmatprep.subr.mxu0 0.0
  %233 = vmatpush2.msra.mxu0 0.0
  %234 = vmatprep.subr.mxu0 0.0
  %235 = vmatpush2.msra.mxu0 0.0
  %236 = vmatprep.mubr.f32.mxu0 0.0
  %237 = vmatmul.mubr.f32.gmra.mxu0 %v65
  %v238 = vpop.f32.mrf.mxu0
  %v239 = vadd.f32 0.0, %v238
  %v240 = vpop.f32.mrf.mxu0
  %241 = vmatprep.mubr.f32.mxu0 0.0
  %242 = vmatmul.mubr.f32.gmra.mxu0 %v68
  %v243 = vpop.f32.mrf.mxu0
  %v244 = vadd.f32 0.0, %v243
  %v245 = vpop.f32.mrf.mxu0
  %246 = vmatprep.mubr.f32.mxu0 0.0
  %247 = vmatmul.mubr.f32.gmra.mxu0 %v71
  %v248 = vpop.f32.mrf.mxu0
  %v249 = vadd.f32 0.0, %v248
  %v250 = vpop.f32.mrf.mxu0
  %251 = vmatprep.mubr.f32.mxu0 0.0
  %252 = vmatmul.mubr.f32.gmra.mxu0 %v74
  %v253 = vpop.f32.mrf.mxu0
  %v254 = vadd.f32 0.0, %v253
  %v255 = vpop.f32.mrf.mxu0
  %256 = vmatprep.mubr.f32.mxu0 0.0
  %257 = vmatmul.mubr.f32.gmra.mxu0 %v77
  %v258 = vpop.f32.mrf.mxu0
  %v259 = vadd.f32 0.0, %v258
  %v260 = vpop.f32.mrf.mxu0
  %261 = vmatprep.mubr.f32.mxu0 0.0
  %262 = vmatmul.mubr.f32.gmra.mxu0 %v80
  %v263 = vpop.f32.mrf.mxu0
  %v264 = vadd.f32 0.0, %v263
  %v265 = vpop.f32.mrf.mxu0
  %266 = vmatprep.mubr.f32.mxu0 0.0
  %267 = vmatmul.mubr.f32.gmra.mxu0 %v83
  %v268 = vpop.f32.mrf.mxu0
  %v269 = vadd.f32 0.0, %v268
  %v270 = vpop.f32.mrf.mxu0
  %271 = vmatprep.mubr.f32.mxu0 0.0
  %272 = vmatmul.mubr.f32.gmra.mxu0 %v86
  %v273 = vpop.f32.mrf.mxu0
  %v274 = vadd.f32 0.0, %v273
  %v275 = vpop.f32.mrf.mxu0
  %276 = vmatprep.mubr.f32.mxu0 0.0
  %277 = vmatmul.mubr.f32.gmra.mxu0 %v89
  %v278 = vpop.f32.mrf.mxu0
  %v279 = vadd.f32 0.0, %v278
  %v280 = vpop.f32.mrf.mxu0
  %281 = vmatprep.mubr.f32.mxu0 0.0
  %282 = vmatmul.mubr.f32.gmra.mxu0 %v92
  %v283 = vpop.f32.mrf.mxu0
  %v284 = vadd.f32 0.0, %v283
  %v285 = vpop.f32.mrf.mxu0
  %286 = vmatprep.mubr.f32.mxu0 0.0
  %287 = vmatmul.mubr.f32.gmra.mxu0 %v95
  %v288 = vpop.f32.mrf.mxu0
  %v289 = vadd.f32 0.0, %v288
  %v290 = vpop.f32.mrf.mxu0
  %291 = vmatprep.mubr.f32.mxu0 0.0
  %292 = vmatmul.mubr.f32.gmra.mxu0 %v98
  %v293 = vpop.f32.mrf.mxu0
  %v294 = vadd.f32 0.0, %v293
  %v295 = vpop.f32.mrf.mxu0
  %296 = vmatprep.mubr.f32.mxu0 0.0
  %297 = vmatmul.mubr.f32.gmra.mxu0 %v101
  %v298 = vpop.f32.mrf.mxu0
  %v299 = vadd.f32 0.0, %v298
  %v300 = vpop.f32.mrf.mxu0
  %301 = vmatprep.mubr.f32.mxu0 0.0
  %302 = vmatmul.mubr.f32.gmra.mxu0 %v104
  %v303 = vpop.f32.mrf.mxu0
  %v304 = vadd.f32 0.0, %v303
  %v305 = vpop.f32.mrf.mxu0
  %306 = vmatprep.mubr.f32.mxu0 0.0
  %307 = vmatmul.mubr.f32.gmra.mxu0 %v107
  %v308 = vpop.f32.mrf.mxu0
  %v309 = vadd.f32 0.0, %v308
  %v310 = vpop.f32.mrf.mxu0
  %311 = vmatprep.mubr.f32.mxu0 0.0
  %312 = vmatmul.mubr.f32.gmra.mxu0 %v110
  %v313 = vpop.f32.mrf.mxu0
  %v314 = vadd.f32 0.0, %v313
  %v315 = vpop.f32.mrf.mxu0
  %316 = vmatprep.mubr.f32.mxu0 0.0
  %317 = vmatmul.mubr.f32.gmra.mxu0 %v113
  %v318 = vpop.f32.mrf.mxu0
  %v319 = vadd.f32 0.0, %v318
  %v320 = vpop.f32.mrf.mxu0
  %321 = vmatprep.mubr.f32.mxu0 0.0
  %322 = vmatmul.mubr.f32.gmra.mxu0 %v116
  %v323 = vpop.f32.mrf.mxu0
  %v324 = vadd.f32 0.0, %v323
  %v325 = vpop.f32.mrf.mxu0
  %326 = vmatprep.mubr.f32.mxu0 0.0
  %327 = vmatmul.mubr.f32.gmra.mxu0 %v119
  %v328 = vpop.f32.mrf.mxu0
  %v329 = vadd.f32 0.0, %v328
  %v330 = vpop.f32.mrf.mxu0
  %331 = vmatprep.mubr.f32.mxu0 0.0
  %332 = vmatmul.mubr.f32.gmra.mxu0 %v122
  %v333 = vpop.f32.mrf.mxu0
  %v334 = vadd.f32 0.0, %v333
  %v335 = vpop.f32.mrf.mxu0
  %336 = vmatprep.mubr.f32.mxu0 0.0
  %337 = vmatmul.mubr.f32.gmra.mxu0 %v125
  %v338 = vpop.f32.mrf.mxu0
  %v339 = vadd.f32 0.0, %v338
  %v340 = vpop.f32.mrf.mxu0
  %341 = vmatprep.mubr.f32.mxu0 0.0
  %342 = vmatmul.mubr.f32.gmra.mxu0 %v128
  %v343 = vpop.f32.mrf.mxu0
  %v344 = vadd.f32 0.0, %v343
  %v345 = vpop.f32.mrf.mxu0
  %346 = vmatprep.mubr.f32.mxu0 0.0
  %347 = vmatmul.mubr.f32.gmra.mxu0 %v131
  %v348 = vpop.f32.mrf.mxu0
  %v349 = vadd.f32 0.0, %v348
  %v350 = vpop.f32.mrf.mxu0
  %351 = vmatprep.mubr.f32.mxu0 0.0
  %352 = vmatmul.mubr.f32.gmra.mxu0 %v134
  %v353 = vpop.f32.mrf.mxu0
  %v354 = vadd.f32 0.0, %v353
  %v355 = vpop.f32.mrf.mxu0
  %356 = vmatprep.mubr.f32.mxu0 0.0
  %357 = vmatmul.mubr.f32.gmra.mxu0 %v137
  %v358 = vpop.f32.mrf.mxu0
  %v359 = vadd.f32 0.0, %v358
  %v360 = vpop.f32.mrf.mxu0
  %361 = vmatprep.mubr.f32.mxu0 0.0
  %362 = vmatmul.mubr.f32.gmra.mxu0 %v140
  %v363 = vpop.f32.mrf.mxu0
  %v364 = vadd.f32 0.0, %v363
  %v365 = vpop.f32.mrf.mxu0
  %366 = vmatprep.mubr.f32.mxu0 0.0
  %367 = vmatmul.mubr.f32.gmra.mxu0 %v143
  %v368 = vpop.f32.mrf.mxu0
  %v369 = vadd.f32 0.0, %v368
  %v370 = vpop.f32.mrf.mxu0
  %371 = vmatprep.mubr.f32.mxu0 0.0
  %372 = vmatmul.mubr.f32.gmra.mxu0 %v146
  %v373 = vpop.f32.mrf.mxu0
  %v374 = vadd.f32 0.0, %v373
  %v375 = vpop.f32.mrf.mxu0
  %376 = vmatprep.mubr.f32.mxu0 0.0
  %377 = vmatmul.mubr.f32.gmra.mxu0 %v149
  %v378 = vpop.f32.mrf.mxu0
  %v379 = vadd.f32 0.0, %v378
  %v380 = vpop.f32.mrf.mxu0
  %381 = vmatprep.mubr.f32.mxu0 0.0
  %382 = vmatmul.mubr.f32.gmra.mxu0 %v152
  %v383 = vpop.f32.mrf.mxu0
  %v384 = vadd.f32 0.0, %v383
  %v385 = vpop.f32.mrf.mxu0
  %386 = vmatprep.mubr.f32.mxu0 0.0
  %387 = vmatmul.mubr.f32.gmra.mxu0 %v155
  %v388 = vpop.f32.mrf.mxu0
  %v389 = vadd.f32 0.0, %v388
  %v390 = vpop.f32.mrf.mxu0
  %391 = vmatprep.mubr.f32.mxu0 0.0
  %392 = vmatmul.mubr.f32.gmra.mxu0 %v158
  %v393 = vpop.f32.mrf.mxu0
  %v394 = vadd.f32 0.0, %v393
  %v395 = vpop.f32.mrf.mxu0
  %396 = vmatprep.mubr.f32.mxu0 0.0
  %397 = vmatmul.mubr.f32.gmra.mxu0 %v161
  %v398 = vpop.f32.mrf.mxu0
  %v399 = vadd.f32 0.0, %v398
  %v400 = vpop.f32.mrf.mxu0
  %401 = vmatprep.mubr.f32.mxu0 0.0
  %402 = vmatmul.mubr.f32.gmra.mxu0 %v164
  %v403 = vpop.f32.mrf.mxu0
  %v404 = vadd.f32 0.0, %v403
  %v405 = vpop.f32.mrf.mxu0
  %406 = vmatprep.mubr.f32.mxu0 0.0
  %407 = vmatmul.mubr.f32.gmra.mxu0 %v167
  %v408 = vpop.f32.mrf.mxu0
  %v409 = vadd.f32 0.0, %v408
  %v410 = vpop.f32.mrf.mxu0
  %411 = vmatprep.mubr.f32.mxu0 0.0
  %412 = vmatmul.mubr.f32.gmra.mxu0 %v170
  %v413 = vpop.f32.mrf.mxu0
  %v414 = vadd.f32 0.0, %v413
  %v415 = vpop.f32.mrf.mxu0
  %416 = vdwg.mxu0
  %v417 = vld [vmem:[%s1] sm:$0xff]
  %v418 = vld [vmem:[%s1 + $0x8] sm:$0xff]
  %v419 = vld [vmem:[%s1 + $0x10] sm:$0xff]
  %v420 = vld [vmem:[%s1 + $0x18] sm:$0xff]
  %v421 = vld [vmem:[%s1 + $0x20] sm:$0xff]
  %v422 = vld [vmem:[%s1 + $0x28] sm:$0xff]
  %v423 = vld [vmem:[%s1 + $0x30] sm:$0xff]
  %v424 = vld [vmem:[%s1 + $0x38] sm:$0xff]
  %v425 = vld [vmem:[%s1 + $0x40] sm:$0xff]
  %v426 = vld [vmem:[%s1 + $0x48] sm:$0xff]
  %v427 = vld [vmem:[%s1 + $0x50] sm:$0xff]
  %v428 = vld [vmem:[%s1 + $0x58] sm:$0xff]
  %v429 = vld [vmem:[%s1 + $0x60] sm:$0xff]
  %v430 = vld [vmem:[%s1 + $0x68] sm:$0xff]
  %v431 = vld [vmem:[%s1 + $0x70] sm:$0xff]
  %v432 = vld [vmem:[%s1 + $0x78] sm:$0xff]
  %v433 = vld [vmem:[%s1 + $0x80] sm:$0xff]
  %v434 = vld [vmem:[%s1 + $0x88] sm:$0xff]
  %v435 = vld [vmem:[%s1 + $0x90] sm:$0xff]
  %v436 = vld [vmem:[%s1 + $0x98] sm:$0xff]
  %v437 = vld [vmem:[%s1 + $0xa0] sm:$0xff]
  %v438 = vld [vmem:[%s1 + $0xa8] sm:$0xff]
  %v439 = vld [vmem:[%s1 + $0xb0] sm:$0xff]
  %v440 = vld [vmem:[%s1 + $0xb8] sm:$0xff]
  %v441 = vld [vmem:[%s1 + $0xc0] sm:$0xff]
  %v442 = vld [vmem:[%s1 + $0xc8] sm:$0xff]
  %v443 = vld [vmem:[%s1 + $0xd0] sm:$0xff]
  %v444 = vld [vmem:[%s1 + $0xd8] sm:$0xff]
  %v445 = vld [vmem:[%s1 + $0xe0] sm:$0xff]
  %v446 = vld [vmem:[%s1 + $0xe8] sm:$0xff]
  %v447 = vld [vmem:[%s1 + $0xf0] sm:$0xff]
  %v448 = vld [vmem:[%s1 + $0xf8] sm:$0xff]
  %v449 = vld [vmem:[%s1 + $0x100] sm:$0xff]
  %v450 = vld [vmem:[%s1 + $0x108] sm:$0xff]
  %v451 = vld [vmem:[%s1 + $0x110] sm:$0xff]
  %v452 = vld [vmem:[%s1 + $0x118] sm:$0xff]
  %v454 = vsel %vm63, %v417, 0
  %v457 = vsel %vm63, %v418, 0
  %v460 = vsel %vm63, %v419, 0
  %v463 = vsel %vm63, %v420, 0
  %v466 = vsel %vm63, %v421, 0
  %v469 = vsel %vm63, %v422, 0
  %v472 = vsel %vm63, %v423, 0
  %v475 = vsel %vm63, %v424, 0
  %v478 = vsel %vm63, %v425, 0
  %v481 = vsel %vm63, %v426, 0
  %v484 = vsel %vm63, %v427, 0
  %v487 = vsel %vm63, %v428, 0
  %v490 = vsel %vm63, %v429, 0
  %v493 = vsel %vm63, %v430, 0
  %v496 = vsel %vm63, %v431, 0
  %v499 = vsel %vm63, %v432, 0
  %v502 = vsel %vm63, %v433, 0
  %v505 = vsel %vm63, %v434, 0
  %v508 = vsel %vm63, %v435, 0
  %v511 = vsel %vm63, %v436, 0
  %v514 = vsel %vm63, %v437, 0
  %v517 = vsel %vm63, %v438, 0
  %v520 = vsel %vm63, %v439, 0
  %v523 = vsel %vm63, %v440, 0
  %v526 = vsel %vm63, %v441, 0
  %v529 = vsel %vm63, %v442, 0
  %v532 = vsel %vm63, %v443, 0
  %v535 = vsel %vm63, %v444, 0
  %v538 = vsel %vm63, %v445, 0
  %v541 = vsel %vm63, %v446, 0
  %v544 = vsel %vm63, %v447, 0
  %v547 = vsel %vm63, %v448, 0
  %v550 = vsel %vm63, %v449, 0
  %v553 = vsel %vm63, %v450, 0
  %v556 = vsel %vm63, %v451, 0
  %v559 = vsel %vm63, %v452, 0
  %561 = vmatprep.subr.mxu0 0.0
  %562 = vmatpush1.msra.mxu0 0.0
  %563 = vmatprep.subr.mxu0 0.0
  %564 = vmatpush1.msra.mxu0 0.0
  %565 = vmatprep.subr.mxu0 0.0
  %566 = vmatpush1.msra.mxu0 0.0
  %567 = vmatprep.subr.mxu0 0.0
  %568 = vmatpush1.msra.mxu0 0.0
  %569 = vmatprep.subr.mxu0 0.0
  %570 = vmatpush1.msra.mxu0 0.0
  %571 = vmatprep.subr.mxu0 0.0
  %572 = vmatpush1.msra.mxu0 0.0
  %573 = vmatprep.subr.mxu0 0.0
  %574 = vmatpush1.msra.mxu0 0.0
  %575 = vmatprep.subr.mxu0 0.0
  %576 = vmatpush1.msra.mxu0 0.0
  %577 = vmatprep.subr.mxu0 0.0
  %578 = vmatpush1.msra.mxu0 0.0
  %579 = vmatprep.subr.mxu0 0.0
  %580 = vmatpush1.msra.mxu0 0.0
  %581 = vmatprep.subr.mxu0 0.0
  %582 = vmatpush1.msra.mxu0 0.0
  %583 = vmatprep.subr.mxu0 0.0
  %584 = vmatpush1.msra.mxu0 0.0
  %585 = vmatprep.subr.mxu0 0.0
  %586 = vmatpush1.msra.mxu0 %v26
  %587 = vmatprep.subr.mxu0 0.0
  %588 = vmatpush1.msra.mxu0 %v25
  %589 = vmatprep.subr.mxu0 0.0
  %590 = vmatpush1.msra.mxu0 %v24
  %591 = vmatprep.subr.mxu0 0.0
  %592 = vmatpush1.msra.mxu0 %v23
  %593 = vmatprep.subr.mxu0 0.0
  %594 = vmatpush2.msra.mxu0 0.0
  %595 = vmatprep.subr.mxu0 0.0
  %596 = vmatpush2.msra.mxu0 0.0
  %597 = vmatprep.subr.mxu0 0.0
  %598 = vmatpush2.msra.mxu0 0.0
  %599 = vmatprep.subr.mxu0 0.0
  %600 = vmatpush2.msra.mxu0 0.0
  %601 = vmatprep.subr.mxu0 0.0
  %602 = vmatpush2.msra.mxu0 0.0
  %603 = vmatprep.subr.mxu0 0.0
  %604 = vmatpush2.msra.mxu0 0.0
  %605 = vmatprep.subr.mxu0 0.0
  %606 = vmatpush2.msra.mxu0 0.0
  %607 = vmatprep.subr.mxu0 0.0
  %608 = vmatpush2.msra.mxu0 0.0
  %609 = vmatprep.subr.mxu0 0.0
  %610 = vmatpush2.msra.mxu0 0.0
  %611 = vmatprep.subr.mxu0 0.0
  %612 = vmatpush2.msra.mxu0 0.0
  %613 = vmatprep.subr.mxu0 0.0
  %614 = vmatpush2.msra.mxu0 0.0
  %615 = vmatprep.subr.mxu0 0.0
  %616 = vmatpush2.msra.mxu0 0.0
  %617 = vmatprep.subr.mxu0 0.0
  %618 = vmatpush2.msra.mxu0 0.0
  %619 = vmatprep.subr.mxu0 0.0
  %620 = vmatpush2.msra.mxu0 0.0
  %621 = vmatprep.subr.mxu0 0.0
  %622 = vmatpush2.msra.mxu0 0.0
  %623 = vmatprep.subr.mxu0 0.0
  %624 = vmatpush2.msra.mxu0 0.0
  %625 = vmatprep.mubr.f32.mxu0 0.0
  %626 = vmatmul.mubr.f32.gmra.mxu0 %v454
  %v627 = vpop.f32.mrf.mxu0
  %v628 = vadd.f32 0.0, %v627
  %v629 = vpop.f32.mrf.mxu0
  %630 = vmatprep.mubr.f32.mxu0 0.0
  %631 = vmatmul.mubr.f32.gmra.mxu0 %v457
  %v632 = vpop.f32.mrf.mxu0
  %v633 = vadd.f32 0.0, %v632
  %v634 = vpop.f32.mrf.mxu0
  %635 = vmatprep.mubr.f32.mxu0 0.0
  %636 = vmatmul.mubr.f32.gmra.mxu0 %v460
  %v637 = vpop.f32.mrf.mxu0
  %v638 = vadd.f32 0.0, %v637
  %v639 = vpop.f32.mrf.mxu0
  %640 = vmatprep.mubr.f32.mxu0 0.0
  %641 = vmatmul.mubr.f32.gmra.mxu0 %v463
  %v642 = vpop.f32.mrf.mxu0
  %v643 = vadd.f32 0.0, %v642
  %v644 = vpop.f32.mrf.mxu0
  %645 = vmatprep.mubr.f32.mxu0 0.0
  %646 = vmatmul.mubr.f32.gmra.mxu0 %v466
  %v647 = vpop.f32.mrf.mxu0
  %v648 = vadd.f32 0.0, %v647
  %v649 = vpop.f32.mrf.mxu0
  %650 = vmatprep.mubr.f32.mxu0 0.0
  %651 = vmatmul.mubr.f32.gmra.mxu0 %v469
  %v652 = vpop.f32.mrf.mxu0
  %v653 = vadd.f32 0.0, %v652
  %v654 = vpop.f32.mrf.mxu0
  %655 = vmatprep.mubr.f32.mxu0 0.0
  %656 = vmatmul.mubr.f32.gmra.mxu0 %v472
  %v657 = vpop.f32.mrf.mxu0
  %v658 = vadd.f32 0.0, %v657
  %v659 = vpop.f32.mrf.mxu0
  %660 = vmatprep.mubr.f32.mxu0 0.0
  %661 = vmatmul.mubr.f32.gmra.mxu0 %v475
  %v662 = vpop.f32.mrf.mxu0
  %v663 = vadd.f32 0.0, %v662
  %v664 = vpop.f32.mrf.mxu0
  %665 = vmatprep.mubr.f32.mxu0 0.0
  %666 = vmatmul.mubr.f32.gmra.mxu0 %v478
  %v667 = vpop.f32.mrf.mxu0
  %v668 = vadd.f32 0.0, %v667
  %v669 = vpop.f32.mrf.mxu0
  %670 = vmatprep.mubr.f32.mxu0 0.0
  %671 = vmatmul.mubr.f32.gmra.mxu0 %v481
  %v672 = vpop.f32.mrf.mxu0
  %v673 = vadd.f32 0.0, %v672
  %v674 = vpop.f32.mrf.mxu0
  %675 = vmatprep.mubr.f32.mxu0 0.0
  %676 = vmatmul.mubr.f32.gmra.mxu0 %v484
  %v677 = vpop.f32.mrf.mxu0
  %v678 = vadd.f32 0.0, %v677
  %v679 = vpop.f32.mrf.mxu0
  %680 = vmatprep.mubr.f32.mxu0 0.0
  %681 = vmatmul.mubr.f32.gmra.mxu0 %v487
  %v682 = vpop.f32.mrf.mxu0
  %v683 = vadd.f32 0.0, %v682
  %v684 = vpop.f32.mrf.mxu0
  %685 = vmatprep.mubr.f32.mxu0 0.0
  %686 = vmatmul.mubr.f32.gmra.mxu0 %v490
  %v687 = vpop.f32.mrf.mxu0
  %v688 = vadd.f32 0.0, %v687
  %v689 = vpop.f32.mrf.mxu0
  %690 = vmatprep.mubr.f32.mxu0 0.0
  %691 = vmatmul.mubr.f32.gmra.mxu0 %v493
  %v692 = vpop.f32.mrf.mxu0
  %v693 = vadd.f32 0.0, %v692
  %v694 = vpop.f32.mrf.mxu0
  %695 = vmatprep.mubr.f32.mxu0 0.0
  %696 = vmatmul.mubr.f32.gmra.mxu0 %v496
  %v697 = vpop.f32.mrf.mxu0
  %v698 = vadd.f32 0.0, %v697
  %v699 = vpop.f32.mrf.mxu0
  %700 = vmatprep.mubr.f32.mxu0 0.0
  %701 = vmatmul.mubr.f32.gmra.mxu0 %v499
  %v702 = vpop.f32.mrf.mxu0
  %v703 = vadd.f32 0.0, %v702
  %v704 = vpop.f32.mrf.mxu0
  %705 = vmatprep.mubr.f32.mxu0 0.0
  %706 = vmatmul.mubr.f32.gmra.mxu0 %v502
  %v707 = vpop.f32.mrf.mxu0
  %v708 = vadd.f32 0.0, %v707
  %v709 = vpop.f32.mrf.mxu0
  %710 = vmatprep.mubr.f32.mxu0 0.0
  %711 = vmatmul.mubr.f32.gmra.mxu0 %v505
  %v712 = vpop.f32.mrf.mxu0
  %v713 = vadd.f32 0.0, %v712
  %v714 = vpop.f32.mrf.mxu0
  %715 = vmatprep.mubr.f32.mxu0 0.0
  %716 = vmatmul.mubr.f32.gmra.mxu0 %v508
  %v717 = vpop.f32.mrf.mxu0
  %v718 = vadd.f32 0.0, %v717
  %v719 = vpop.f32.mrf.mxu0
  %720 = vmatprep.mubr.f32.mxu0 0.0
  %721 = vmatmul.mubr.f32.gmra.mxu0 %v511
  %v722 = vpop.f32.mrf.mxu0
  %v723 = vadd.f32 0.0, %v722
  %v724 = vpop.f32.mrf.mxu0
  %725 = vmatprep.mubr.f32.mxu0 0.0
  %726 = vmatmul.mubr.f32.gmra.mxu0 %v514
  %v727 = vpop.f32.mrf.mxu0
  %v728 = vadd.f32 0.0, %v727
  %v729 = vpop.f32.mrf.mxu0
  %730 = vmatprep.mubr.f32.mxu0 0.0
  %731 = vmatmul.mubr.f32.gmra.mxu0 %v517
  %v732 = vpop.f32.mrf.mxu0
  %v733 = vadd.f32 0.0, %v732
  %v734 = vpop.f32.mrf.mxu0
  %735 = vmatprep.mubr.f32.mxu0 0.0
  %736 = vmatmul.mubr.f32.gmra.mxu0 %v520
  %v737 = vpop.f32.mrf.mxu0
  %v738 = vadd.f32 0.0, %v737
  %v739 = vpop.f32.mrf.mxu0
  %740 = vmatprep.mubr.f32.mxu0 0.0
  %741 = vmatmul.mubr.f32.gmra.mxu0 %v523
  %v742 = vpop.f32.mrf.mxu0
  %v743 = vadd.f32 0.0, %v742
  %v744 = vpop.f32.mrf.mxu0
  %745 = vmatprep.mubr.f32.mxu0 0.0
  %746 = vmatmul.mubr.f32.gmra.mxu0 %v526
  %v747 = vpop.f32.mrf.mxu0
  %v748 = vadd.f32 0.0, %v747
  %v749 = vpop.f32.mrf.mxu0
  %750 = vmatprep.mubr.f32.mxu0 0.0
  %751 = vmatmul.mubr.f32.gmra.mxu0 %v529
  %v752 = vpop.f32.mrf.mxu0
  %v753 = vadd.f32 0.0, %v752
  %v754 = vpop.f32.mrf.mxu0
  %755 = vmatprep.mubr.f32.mxu0 0.0
  %756 = vmatmul.mubr.f32.gmra.mxu0 %v532
  %v757 = vpop.f32.mrf.mxu0
  %v758 = vadd.f32 0.0, %v757
  %v759 = vpop.f32.mrf.mxu0
  %760 = vmatprep.mubr.f32.mxu0 0.0
  %761 = vmatmul.mubr.f32.gmra.mxu0 %v535
  %v762 = vpop.f32.mrf.mxu0
  %v763 = vadd.f32 0.0, %v762
  %v764 = vpop.f32.mrf.mxu0
  %765 = vmatprep.mubr.f32.mxu0 0.0
  %766 = vmatmul.mubr.f32.gmra.mxu0 %v538
  %v767 = vpop.f32.mrf.mxu0
  %v768 = vadd.f32 0.0, %v767
  %v769 = vpop.f32.mrf.mxu0
  %770 = vmatprep.mubr.f32.mxu0 0.0
  %771 = vmatmul.mubr.f32.gmra.mxu0 %v541
  %v772 = vpop.f32.mrf.mxu0
  %v773 = vadd.f32 0.0, %v772
  %v774 = vpop.f32.mrf.mxu0
  %775 = vmatprep.mubr.f32.mxu0 0.0
  %776 = vmatmul.mubr.f32.gmra.mxu0 %v544
  %v777 = vpop.f32.mrf.mxu0
  %v778 = vadd.f32 0.0, %v777
  %v779 = vpop.f32.mrf.mxu0
  %780 = vmatprep.mubr.f32.mxu0 0.0
  %781 = vmatmul.mubr.f32.gmra.mxu0 %v547
  %v782 = vpop.f32.mrf.mxu0
  %v783 = vadd.f32 0.0, %v782
  %v784 = vpop.f32.mrf.mxu0
  %785 = vmatprep.mubr.f32.mxu0 0.0
  %786 = vmatmul.mubr.f32.gmra.mxu0 %v550
  %v787 = vpop.f32.mrf.mxu0
  %v788 = vadd.f32 0.0, %v787
  %v789 = vpop.f32.mrf.mxu0
  %790 = vmatprep.mubr.f32.mxu0 0.0
  %791 = vmatmul.mubr.f32.gmra.mxu0 %v553
  %v792 = vpop.f32.mrf.mxu0
  %v793 = vadd.f32 0.0, %v792
  %v794 = vpop.f32.mrf.mxu0
  %795 = vmatprep.mubr.f32.mxu0 0.0
  %796 = vmatmul.mubr.f32.gmra.mxu0 %v556
  %v797 = vpop.f32.mrf.mxu0
  %v798 = vadd.f32 0.0, %v797
  %v799 = vpop.f32.mrf.mxu0
  %800 = vmatprep.mubr.f32.mxu0 0.0
  %801 = vmatmul.mubr.f32.gmra.mxu0 %v559
  %v802 = vpop.f32.mrf.mxu0
  %v803 = vadd.f32 0.0, %v802
  %v804 = vpop.f32.mrf.mxu0
  %805 = vdwg.mxu0
  %v806 = vmax.f32 %v239, %v628
  %v807 = vmax.f32 %v244, %v633
  %v808 = vmax.f32 %v249, %v638
  %v809 = vmax.f32 %v254, %v643
  %v810 = vmax.f32 %v259, %v648
  %v811 = vmax.f32 %v264, %v653
  %v812 = vmax.f32 %v269, %v658
  %v813 = vmax.f32 %v274, %v663
  %v814 = vmax.f32 %v279, %v668
  %v815 = vmax.f32 %v284, %v673
  %v816 = vmax.f32 %v289, %v678
  %v817 = vmax.f32 %v294, %v683
  %v818 = vmax.f32 %v299, %v688
  %v819 = vmax.f32 %v304, %v693
  %v820 = vmax.f32 %v309, %v698
  %v821 = vmax.f32 %v314, %v703
  %v822 = vmax.f32 %v319, %v708
  %v823 = vmax.f32 %v324, %v713
  %v824 = vmax.f32 %v329, %v718
  %v825 = vmax.f32 %v334, %v723
  %v826 = vmax.f32 %v339, %v728
  %v827 = vmax.f32 %v344, %v733
  %v828 = vmax.f32 %v349, %v738
  %v829 = vmax.f32 %v354, %v743
  %v830 = vmax.f32 %v359, %v748
  %v831 = vmax.f32 %v364, %v753
  %v832 = vmax.f32 %v369, %v758
  %v833 = vmax.f32 %v374, %v763
  %v834 = vmax.f32 %v379, %v768
  %v835 = vmax.f32 %v384, %v773
  %v836 = vmax.f32 %v389, %v778
  %v837 = vmax.f32 %v394, %v783
  %v838 = vmax.f32 %v399, %v788
  %v839 = vmax.f32 %v404, %v793
  %v840 = vmax.f32 %v409, %v798
  %v841 = vmax.f32 %v414, %v803
  %v842 = vld [vmem:[%s2] sm:$0xff]
  %v843 = vld [vmem:[%s2 + $0x8] sm:$0xff]
  %v844 = vld [vmem:[%s2 + $0x10] sm:$0xff]
  %v845 = vld [vmem:[%s2 + $0x18] sm:$0xff]
  %v846 = vld [vmem:[%s2 + $0x20] sm:$0xff]
  %v847 = vld [vmem:[%s2 + $0x28] sm:$0xff]
  %v848 = vld [vmem:[%s2 + $0x30] sm:$0xff]
  %v849 = vld [vmem:[%s2 + $0x38] sm:$0xff]
  %v850 = vld [vmem:[%s2 + $0x40] sm:$0xff]
  %v851 = vld [vmem:[%s2 + $0x48] sm:$0xff]
  %v852 = vld [vmem:[%s2 + $0x50] sm:$0xff]
  %v853 = vld [vmem:[%s2 + $0x58] sm:$0xff]
  %v854 = vld [vmem:[%s2 + $0x60] sm:$0xff]
  %v855 = vld [vmem:[%s2 + $0x68] sm:$0xff]
  %v856 = vld [vmem:[%s2 + $0x70] sm:$0xff]
  %v857 = vld [vmem:[%s2 + $0x78] sm:$0xff]
  %v858 = vld [vmem:[%s2 + $0x80] sm:$0xff]
  %v859 = vld [vmem:[%s2 + $0x88] sm:$0xff]
  %v860 = vld [vmem:[%s2 + $0x90] sm:$0xff]
  %v861 = vld [vmem:[%s2 + $0x98] sm:$0xff]
  %v862 = vld [vmem:[%s2 + $0xa0] sm:$0xff]
  %v863 = vld [vmem:[%s2 + $0xa8] sm:$0xff]
  %v864 = vld [vmem:[%s2 + $0xb0] sm:$0xff]
  %v865 = vld [vmem:[%s2 + $0xb8] sm:$0xff]
  %v866 = vld [vmem:[%s2 + $0xc0] sm:$0xff]
  %v867 = vld [vmem:[%s2 + $0xc8] sm:$0xff]
  %v868 = vld [vmem:[%s2 + $0xd0] sm:$0xff]
  %v869 = vld [vmem:[%s2 + $0xd8] sm:$0xff]
  %v870 = vld [vmem:[%s2 + $0xe0] sm:$0xff]
  %v871 = vld [vmem:[%s2 + $0xe8] sm:$0xff]
  %v872 = vld [vmem:[%s2 + $0xf0] sm:$0xff]
  %v873 = vld [vmem:[%s2 + $0xf8] sm:$0xff]
  %v874 = vld [vmem:[%s2 + $0x100] sm:$0xff]
  %v875 = vld [vmem:[%s2 + $0x108] sm:$0xff]
  %v876 = vld [vmem:[%s2 + $0x110] sm:$0xff]
  %v877 = vld [vmem:[%s2 + $0x118] sm:$0xff]
  %v879 = vsel %vm63, %v842, 0
  %v882 = vsel %vm63, %v843, 0
  %v885 = vsel %vm63, %v844, 0
  %v888 = vsel %vm63, %v845, 0
  %v891 = vsel %vm63, %v846, 0
  %v894 = vsel %vm63, %v847, 0
  %v897 = vsel %vm63, %v848, 0
  %v900 = vsel %vm63, %v849, 0
  %v903 = vsel %vm63, %v850, 0
  %v906 = vsel %vm63, %v851, 0
  %v909 = vsel %vm63, %v852, 0
  %v912 = vsel %vm63, %v853, 0
  %v915 = vsel %vm63, %v854, 0
  %v918 = vsel %vm63, %v855, 0
  %v921 = vsel %vm63, %v856, 0
  %v924 = vsel %vm63, %v857, 0
  %v927 = vsel %vm63, %v858, 0
  %v930 = vsel %vm63, %v859, 0
  %v933 = vsel %vm63, %v860, 0
  %v936 = vsel %vm63, %v861, 0
  %v939 = vsel %vm63, %v862, 0
  %v942 = vsel %vm63, %v863, 0
  %v945 = vsel %vm63, %v864, 0
  %v948 = vsel %vm63, %v865, 0
  %v951 = vsel %vm63, %v866, 0
  %v954 = vsel %vm63, %v867, 0
  %v957 = vsel %vm63, %v868, 0
  %v960 = vsel %vm63, %v869, 0
  %v963 = vsel %vm63, %v870, 0
  %v966 = vsel %vm63, %v871, 0
  %v969 = vsel %vm63, %v872, 0
  %v972 = vsel %vm63, %v873, 0
  %v975 = vsel %vm63, %v874, 0
  %v978 = vsel %vm63, %v875, 0
  %v981 = vsel %vm63, %v876, 0
  %v984 = vsel %vm63, %v877, 0
  %986 = vmatprep.subr.mxu0 0.0
  %987 = vmatpush1.msra.mxu0 0.0
  %988 = vmatprep.subr.mxu0 0.0
  %989 = vmatpush1.msra.mxu0 0.0
  %990 = vmatprep.subr.mxu0 0.0
  %991 = vmatpush1.msra.mxu0 0.0
  %992 = vmatprep.subr.mxu0 0.0
  %993 = vmatpush1.msra.mxu0 0.0
  %994 = vmatprep.subr.mxu0 0.0
  %995 = vmatpush1.msra.mxu0 0.0
  %996 = vmatprep.subr.mxu0 0.0
  %997 = vmatpush1.msra.mxu0 0.0
  %998 = vmatprep.subr.mxu0 0.0
  %999 = vmatpush1.msra.mxu0 0.0
  %1000 = vmatprep.subr.mxu0 0.0
  %1001 = vmatpush1.msra.mxu0 0.0
  %1002 = vmatprep.subr.mxu0 0.0
  %1003 = vmatpush1.msra.mxu0 0.0
  %1004 = vmatprep.subr.mxu0 0.0
  %1005 = vmatpush1.msra.mxu0 0.0
  %1006 = vmatprep.subr.mxu0 0.0
  %1007 = vmatpush1.msra.mxu0 0.0
  %1008 = vmatprep.subr.mxu0 0.0
  %1009 = vmatpush1.msra.mxu0 0.0
  %1010 = vmatprep.subr.mxu0 0.0
  %1011 = vmatpush1.msra.mxu0 %v26
  %1012 = vmatprep.subr.mxu0 0.0
  %1013 = vmatpush1.msra.mxu0 %v25
  %1014 = vmatprep.subr.mxu0 0.0
  %1015 = vmatpush1.msra.mxu0 %v24
  %1016 = vmatprep.subr.mxu0 0.0
  %1017 = vmatpush1.msra.mxu0 %v23
  %1018 = vmatprep.subr.mxu0 0.0
  %1019 = vmatpush2.msra.mxu0 0.0
  %1020 = vmatprep.subr.mxu0 0.0
  %1021 = vmatpush2.msra.mxu0 0.0
  %1022 = vmatprep.subr.mxu0 0.0
  %1023 = vmatpush2.msra.mxu0 0.0
  %1024 = vmatprep.subr.mxu0 0.0
  %1025 = vmatpush2.msra.mxu0 0.0
  %1026 = vmatprep.subr.mxu0 0.0
  %1027 = vmatpush2.msra.mxu0 0.0
  %1028 = vmatprep.subr.mxu0 0.0
  %1029 = vmatpush2.msra.mxu0 0.0
  %1030 = vmatprep.subr.mxu0 0.0
  %1031 = vmatpush2.msra.mxu0 0.0
  %1032 = vmatprep.subr.mxu0 0.0
  %1033 = vmatpush2.msra.mxu0 0.0
  %1034 = vmatprep.subr.mxu0 0.0
  %1035 = vmatpush2.msra.mxu0 0.0
  %1036 = vmatprep.subr.mxu0 0.0
  %1037 = vmatpush2.msra.mxu0 0.0
  %1038 = vmatprep.subr.mxu0 0.0
  %1039 = vmatpush2.msra.mxu0 0.0
  %1040 = vmatprep.subr.mxu0 0.0
  %1041 = vmatpush2.msra.mxu0 0.0
  %1042 = vmatprep.subr.mxu0 0.0
  %1043 = vmatpush2.msra.mxu0 0.0
  %1044 = vmatprep.subr.mxu0 0.0
  %1045 = vmatpush2.msra.mxu0 0.0
  %1046 = vmatprep.subr.mxu0 0.0
  %1047 = vmatpush2.msra.mxu0 0.0
  %1048 = vmatprep.subr.mxu0 0.0
  %1049 = vmatpush2.msra.mxu0 0.0
  %1050 = vmatprep.mubr.f32.mxu0 0.0
  %1051 = vmatmul.mubr.f32.gmra.mxu0 %v879
  %v1052 = vpop.f32.mrf.mxu0
  %v1053 = vadd.f32 0.0, %v1052
  %v1054 = vpop.f32.mrf.mxu0
  %1055 = vmatprep.mubr.f32.mxu0 0.0
  %1056 = vmatmul.mubr.f32.gmra.mxu0 %v882
  %v1057 = vpop.f32.mrf.mxu0
  %v1058 = vadd.f32 0.0, %v1057
  %v1059 = vpop.f32.mrf.mxu0
  %1060 = vmatprep.mubr.f32.mxu0 0.0
  %1061 = vmatmul.mubr.f32.gmra.mxu0 %v885
  %v1062 = vpop.f32.mrf.mxu0
  %v1063 = vadd.f32 0.0, %v1062
  %v1064 = vpop.f32.mrf.mxu0
  %1065 = vmatprep.mubr.f32.mxu0 0.0
  %1066 = vmatmul.mubr.f32.gmra.mxu0 %v888
  %v1067 = vpop.f32.mrf.mxu0
  %v1068 = vadd.f32 0.0, %v1067
  %v1069 = vpop.f32.mrf.mxu0
  %1070 = vmatprep.mubr.f32.mxu0 0.0
  %1071 = vmatmul.mubr.f32.gmra.mxu0 %v891
  %v1072 = vpop.f32.mrf.mxu0
  %v1073 = vadd.f32 0.0, %v1072
  %v1074 = vpop.f32.mrf.mxu0
  %1075 = vmatprep.mubr.f32.mxu0 0.0
  %1076 = vmatmul.mubr.f32.gmra.mxu0 %v894
  %v1077 = vpop.f32.mrf.mxu0
  %v1078 = vadd.f32 0.0, %v1077
  %v1079 = vpop.f32.mrf.mxu0
  %1080 = vmatprep.mubr.f32.mxu0 0.0
  %1081 = vmatmul.mubr.f32.gmra.mxu0 %v897
  %v1082 = vpop.f32.mrf.mxu0
  %v1083 = vadd.f32 0.0, %v1082
  %v1084 = vpop.f32.mrf.mxu0
  %1085 = vmatprep.mubr.f32.mxu0 0.0
  %1086 = vmatmul.mubr.f32.gmra.mxu0 %v900
  %v1087 = vpop.f32.mrf.mxu0
  %v1088 = vadd.f32 0.0, %v1087
  %v1089 = vpop.f32.mrf.mxu0
  %1090 = vmatprep.mubr.f32.mxu0 0.0
  %1091 = vmatmul.mubr.f32.gmra.mxu0 %v903
  %v1092 = vpop.f32.mrf.mxu0
  %v1093 = vadd.f32 0.0, %v1092
  %v1094 = vpop.f32.mrf.mxu0
  %1095 = vmatprep.mubr.f32.mxu0 0.0
  %1096 = vmatmul.mubr.f32.gmra.mxu0 %v906
  %v1097 = vpop.f32.mrf.mxu0
  %v1098 = vadd.f32 0.0, %v1097
  %v1099 = vpop.f32.mrf.mxu0
  %1100 = vmatprep.mubr.f32.mxu0 0.0
  %1101 = vmatmul.mubr.f32.gmra.mxu0 %v909
  %v1102 = vpop.f32.mrf.mxu0
  %v1103 = vadd.f32 0.0, %v1102
  %v1104 = vpop.f32.mrf.mxu0
  %1105 = vmatprep.mubr.f32.mxu0 0.0
  %1106 = vmatmul.mubr.f32.gmra.mxu0 %v912
  %v1107 = vpop.f32.mrf.mxu0
  %v1108 = vadd.f32 0.0, %v1107
  %v1109 = vpop.f32.mrf.mxu0
  %1110 = vmatprep.mubr.f32.mxu0 0.0
  %1111 = vmatmul.mubr.f32.gmra.mxu0 %v915
  %v1112 = vpop.f32.mrf.mxu0
  %v1113 = vadd.f32 0.0, %v1112
  %v1114 = vpop.f32.mrf.mxu0
  %1115 = vmatprep.mubr.f32.mxu0 0.0
  %1116 = vmatmul.mubr.f32.gmra.mxu0 %v918
  %v1117 = vpop.f32.mrf.mxu0
  %v1118 = vadd.f32 0.0, %v1117
  %v1119 = vpop.f32.mrf.mxu0
  %1120 = vmatprep.mubr.f32.mxu0 0.0
  %1121 = vmatmul.mubr.f32.gmra.mxu0 %v921
  %v1122 = vpop.f32.mrf.mxu0
  %v1123 = vadd.f32 0.0, %v1122
  %v1124 = vpop.f32.mrf.mxu0
  %1125 = vmatprep.mubr.f32.mxu0 0.0
  %1126 = vmatmul.mubr.f32.gmra.mxu0 %v924
  %v1127 = vpop.f32.mrf.mxu0
  %v1128 = vadd.f32 0.0, %v1127
  %v1129 = vpop.f32.mrf.mxu0
  %1130 = vmatprep.mubr.f32.mxu0 0.0
  %1131 = vmatmul.mubr.f32.gmra.mxu0 %v927
  %v1132 = vpop.f32.mrf.mxu0
  %v1133 = vadd.f32 0.0, %v1132
  %v1134 = vpop.f32.mrf.mxu0
  %1135 = vmatprep.mubr.f32.mxu0 0.0
  %1136 = vmatmul.mubr.f32.gmra.mxu0 %v930
  %v1137 = vpop.f32.mrf.mxu0
  %v1138 = vadd.f32 0.0, %v1137
  %v1139 = vpop.f32.mrf.mxu0
  %1140 = vmatprep.mubr.f32.mxu0 0.0
  %1141 = vmatmul.mubr.f32.gmra.mxu0 %v933
  %v1142 = vpop.f32.mrf.mxu0
  %v1143 = vadd.f32 0.0, %v1142
  %v1144 = vpop.f32.mrf.mxu0
  %1145 = vmatprep.mubr.f32.mxu0 0.0
  %1146 = vmatmul.mubr.f32.gmra.mxu0 %v936
  %v1147 = vpop.f32.mrf.mxu0
  %v1148 = vadd.f32 0.0, %v1147
  %v1149 = vpop.f32.mrf.mxu0
  %1150 = vmatprep.mubr.f32.mxu0 0.0
  %1151 = vmatmul.mubr.f32.gmra.mxu0 %v939
  %v1152 = vpop.f32.mrf.mxu0
  %v1153 = vadd.f32 0.0, %v1152
  %v1154 = vpop.f32.mrf.mxu0
  %1155 = vmatprep.mubr.f32.mxu0 0.0
  %1156 = vmatmul.mubr.f32.gmra.mxu0 %v942
  %v1157 = vpop.f32.mrf.mxu0
  %v1158 = vadd.f32 0.0, %v1157
  %v1159 = vpop.f32.mrf.mxu0
  %1160 = vmatprep.mubr.f32.mxu0 0.0
  %1161 = vmatmul.mubr.f32.gmra.mxu0 %v945
  %v1162 = vpop.f32.mrf.mxu0
  %v1163 = vadd.f32 0.0, %v1162
  %v1164 = vpop.f32.mrf.mxu0
  %1165 = vmatprep.mubr.f32.mxu0 0.0
  %1166 = vmatmul.mubr.f32.gmra.mxu0 %v948
  %v1167 = vpop.f32.mrf.mxu0
  %v1168 = vadd.f32 0.0, %v1167
  %v1169 = vpop.f32.mrf.mxu0
  %1170 = vmatprep.mubr.f32.mxu0 0.0
  %1171 = vmatmul.mubr.f32.gmra.mxu0 %v951
  %v1172 = vpop.f32.mrf.mxu0
  %v1173 = vadd.f32 0.0, %v1172
  %v1174 = vpop.f32.mrf.mxu0
  %1175 = vmatprep.mubr.f32.mxu0 0.0
  %1176 = vmatmul.mubr.f32.gmra.mxu0 %v954
  %v1177 = vpop.f32.mrf.mxu0
  %v1178 = vadd.f32 0.0, %v1177
  %v1179 = vpop.f32.mrf.mxu0
  %1180 = vmatprep.mubr.f32.mxu0 0.0
  %1181 = vmatmul.mubr.f32.gmra.mxu0 %v957
  %v1182 = vpop.f32.mrf.mxu0
  %v1183 = vadd.f32 0.0, %v1182
  %v1184 = vpop.f32.mrf.mxu0
  %1185 = vmatprep.mubr.f32.mxu0 0.0
  %1186 = vmatmul.mubr.f32.gmra.mxu0 %v960
  %v1187 = vpop.f32.mrf.mxu0
  %v1188 = vadd.f32 0.0, %v1187
  %v1189 = vpop.f32.mrf.mxu0
  %1190 = vmatprep.mubr.f32.mxu0 0.0
  %1191 = vmatmul.mubr.f32.gmra.mxu0 %v963
  %v1192 = vpop.f32.mrf.mxu0
  %v1193 = vadd.f32 0.0, %v1192
  %v1194 = vpop.f32.mrf.mxu0
  %1195 = vmatprep.mubr.f32.mxu0 0.0
  %1196 = vmatmul.mubr.f32.gmra.mxu0 %v966
  %v1197 = vpop.f32.mrf.mxu0
  %v1198 = vadd.f32 0.0, %v1197
  %v1199 = vpop.f32.mrf.mxu0
  %1200 = vmatprep.mubr.f32.mxu0 0.0
  %1201 = vmatmul.mubr.f32.gmra.mxu0 %v969
  %v1202 = vpop.f32.mrf.mxu0
  %v1203 = vadd.f32 0.0, %v1202
  %v1204 = vpop.f32.mrf.mxu0
  %1205 = vmatprep.mubr.f32.mxu0 0.0
  %1206 = vmatmul.mubr.f32.gmra.mxu0 %v972
  %v1207 = vpop.f32.mrf.mxu0
  %v1208 = vadd.f32 0.0, %v1207
  %v1209 = vpop.f32.mrf.mxu0
  %1210 = vmatprep.mubr.f32.mxu0 0.0
  %1211 = vmatmul.mubr.f32.gmra.mxu0 %v975
  %v1212 = vpop.f32.mrf.mxu0
  %v1213 = vadd.f32 0.0, %v1212
  %v1214 = vpop.f32.mrf.mxu0
  %1215 = vmatprep.mubr.f32.mxu0 0.0
  %1216 = vmatmul.mubr.f32.gmra.mxu0 %v978
  %v1217 = vpop.f32.mrf.mxu0
  %v1218 = vadd.f32 0.0, %v1217
  %v1219 = vpop.f32.mrf.mxu0
  %1220 = vmatprep.mubr.f32.mxu0 0.0
  %1221 = vmatmul.mubr.f32.gmra.mxu0 %v981
  %v1222 = vpop.f32.mrf.mxu0
  %v1223 = vadd.f32 0.0, %v1222
  %v1224 = vpop.f32.mrf.mxu0
  %1225 = vmatprep.mubr.f32.mxu0 0.0
  %1226 = vmatmul.mubr.f32.gmra.mxu0 %v984
  %v1227 = vpop.f32.mrf.mxu0
  %v1228 = vadd.f32 0.0, %v1227
  %v1229 = vpop.f32.mrf.mxu0
  %1230 = vdwg.mxu0
  %v1231 = vld [vmem:[%s3] sm:$0xff]
  %v1232 = vld [vmem:[%s3 + $0x8] sm:$0xff]
  %v1233 = vld [vmem:[%s3 + $0x10] sm:$0xff]
  %v1234 = vld [vmem:[%s3 + $0x18] sm:$0xff]
  %v1235 = vld [vmem:[%s3 + $0x20] sm:$0xff]
  %v1236 = vld [vmem:[%s3 + $0x28] sm:$0xff]
  %v1237 = vld [vmem:[%s3 + $0x30] sm:$0xff]
  %v1238 = vld [vmem:[%s3 + $0x38] sm:$0xff]
  %v1239 = vld [vmem:[%s3 + $0x40] sm:$0xff]
  %v1240 = vld [vmem:[%s3 + $0x48] sm:$0xff]
  %v1241 = vld [vmem:[%s3 + $0x50] sm:$0xff]
  %v1242 = vld [vmem:[%s3 + $0x58] sm:$0xff]
  %v1243 = vld [vmem:[%s3 + $0x60] sm:$0xff]
  %v1244 = vld [vmem:[%s3 + $0x68] sm:$0xff]
  %v1245 = vld [vmem:[%s3 + $0x70] sm:$0xff]
  %v1246 = vld [vmem:[%s3 + $0x78] sm:$0xff]
  %v1247 = vld [vmem:[%s3 + $0x80] sm:$0xff]
  %v1248 = vld [vmem:[%s3 + $0x88] sm:$0xff]
  %v1249 = vld [vmem:[%s3 + $0x90] sm:$0xff]
  %v1250 = vld [vmem:[%s3 + $0x98] sm:$0xff]
  %v1251 = vld [vmem:[%s3 + $0xa0] sm:$0xff]
  %v1252 = vld [vmem:[%s3 + $0xa8] sm:$0xff]
  %v1253 = vld [vmem:[%s3 + $0xb0] sm:$0xff]
  %v1254 = vld [vmem:[%s3 + $0xb8] sm:$0xff]
  %v1255 = vld [vmem:[%s3 + $0xc0] sm:$0xff]
  %v1256 = vld [vmem:[%s3 + $0xc8] sm:$0xff]
  %v1257 = vld [vmem:[%s3 + $0xd0] sm:$0xff]
  %v1258 = vld [vmem:[%s3 + $0xd8] sm:$0xff]
  %v1259 = vld [vmem:[%s3 + $0xe0] sm:$0xff]
  %v1260 = vld [vmem:[%s3 + $0xe8] sm:$0xff]
  %v1261 = vld [vmem:[%s3 + $0xf0] sm:$0xff]
  %v1262 = vld [vmem:[%s3 + $0xf8] sm:$0xff]
  %v1263 = vld [vmem:[%s3 + $0x100] sm:$0xff]
  %v1264 = vld [vmem:[%s3 + $0x108] sm:$0xff]
  %v1265 = vld [vmem:[%s3 + $0x110] sm:$0xff]
  %v1266 = vld [vmem:[%s3 + $0x118] sm:$0xff]
  %v1268 = vsel %vm63, %v1231, 0
  %v1271 = vsel %vm63, %v1232, 0
  %v1274 = vsel %vm63, %v1233, 0
  %v1277 = vsel %vm63, %v1234, 0
  %v1280 = vsel %vm63, %v1235, 0
  %v1283 = vsel %vm63, %v1236, 0
  %v1286 = vsel %vm63, %v1237, 0
  %v1289 = vsel %vm63, %v1238, 0
  %v1292 = vsel %vm63, %v1239, 0
  %v1295 = vsel %vm63, %v1240, 0
  %v1298 = vsel %vm63, %v1241, 0
  %v1301 = vsel %vm63, %v1242, 0
  %v1304 = vsel %vm63, %v1243, 0
  %v1307 = vsel %vm63, %v1244, 0
  %v1310 = vsel %vm63, %v1245, 0
  %v1313 = vsel %vm63, %v1246, 0
  %v1316 = vsel %vm63, %v1247, 0
  %v1319 = vsel %vm63, %v1248, 0
  %v1322 = vsel %vm63, %v1249, 0
  %v1325 = vsel %vm63, %v1250, 0
  %v1328 = vsel %vm63, %v1251, 0
  %v1331 = vsel %vm63, %v1252, 0
  %v1334 = vsel %vm63, %v1253, 0
  %v1337 = vsel %vm63, %v1254, 0
  %v1340 = vsel %vm63, %v1255, 0
  %v1343 = vsel %vm63, %v1256, 0
  %v1346 = vsel %vm63, %v1257, 0
  %v1349 = vsel %vm63, %v1258, 0
  %v1352 = vsel %vm63, %v1259, 0
  %v1355 = vsel %vm63, %v1260, 0
  %v1358 = vsel %vm63, %v1261, 0
  %v1361 = vsel %vm63, %v1262, 0
  %v1364 = vsel %vm63, %v1263, 0
  %v1367 = vsel %vm63, %v1264, 0
  %v1370 = vsel %vm63, %v1265, 0
  %v1373 = vsel %vm63, %v1266, 0
  %1375 = vmatprep.subr.mxu0 0.0
  %1376 = vmatpush1.msra.mxu0 0.0
  %1377 = vmatprep.subr.mxu0 0.0
  %1378 = vmatpush1.msra.mxu0 0.0
  %1379 = vmatprep.subr.mxu0 0.0
  %1380 = vmatpush1.msra.mxu0 0.0
  %1381 = vmatprep.subr.mxu0 0.0
  %1382 = vmatpush1.msra.mxu0 0.0
  %1383 = vmatprep.subr.mxu0 0.0
  %1384 = vmatpush1.msra.mxu0 0.0
  %1385 = vmatprep.subr.mxu0 0.0
  %1386 = vmatpush1.msra.mxu0 0.0
  %1387 = vmatprep.subr.mxu0 0.0
  %1388 = vmatpush1.msra.mxu0 0.0
  %1389 = vmatprep.subr.mxu0 0.0
  %1390 = vmatpush1.msra.mxu0 0.0
  %1391 = vmatprep.subr.mxu0 0.0
  %1392 = vmatpush1.msra.mxu0 0.0
  %1393 = vmatprep.subr.mxu0 0.0
  %1394 = vmatpush1.msra.mxu0 0.0
  %1395 = vmatprep.subr.mxu0 0.0
  %1396 = vmatpush1.msra.mxu0 0.0
  %1397 = vmatprep.subr.mxu0 0.0
  %1398 = vmatpush1.msra.mxu0 0.0
  %1399 = vmatprep.subr.mxu0 0.0
  %1400 = vmatpush1.msra.mxu0 %v26
  %1401 = vmatprep.subr.mxu0 0.0
  %1402 = vmatpush1.msra.mxu0 %v25
  %1403 = vmatprep.subr.mxu0 0.0
  %1404 = vmatpush1.msra.mxu0 %v24
  %1405 = vmatprep.subr.mxu0 0.0
  %1406 = vmatpush1.msra.mxu0 %v23
  %1407 = vmatprep.subr.mxu0 0.0
  %1408 = vmatpush2.msra.mxu0 0.0
  %1409 = vmatprep.subr.mxu0 0.0
  %1410 = vmatpush2.msra.mxu0 0.0
  %1411 = vmatprep.subr.mxu0 0.0
  %1412 = vmatpush2.msra.mxu0 0.0
  %1413 = vmatprep.subr.mxu0 0.0
  %1414 = vmatpush2.msra.mxu0 0.0
  %1415 = vmatprep.subr.mxu0 0.0
  %1416 = vmatpush2.msra.mxu0 0.0
  %1417 = vmatprep.subr.mxu0 0.0
  %1418 = vmatpush2.msra.mxu0 0.0
  %1419 = vmatprep.subr.mxu0 0.0
  %1420 = vmatpush2.msra.mxu0 0.0
  %1421 = vmatprep.subr.mxu0 0.0
  %1422 = vmatpush2.msra.mxu0 0.0
  %1423 = vmatprep.subr.mxu0 0.0
  %1424 = vmatpush2.msra.mxu0 0.0
  %1425 = vmatprep.subr.mxu0 0.0
  %1426 = vmatpush2.msra.mxu0 0.0
  %1427 = vmatprep.subr.mxu0 0.0
  %1428 = vmatpush2.msra.mxu0 0.0
  %1429 = vmatprep.subr.mxu0 0.0
  %1430 = vmatpush2.msra.mxu0 0.0
  %1431 = vmatprep.subr.mxu0 0.0
  %1432 = vmatpush2.msra.mxu0 0.0
  %1433 = vmatprep.subr.mxu0 0.0
  %1434 = vmatpush2.msra.mxu0 0.0
  %1435 = vmatprep.subr.mxu0 0.0
  %1436 = vmatpush2.msra.mxu0 0.0
  %1437 = vmatprep.subr.mxu0 0.0
  %1438 = vmatpush2.msra.mxu0 0.0
  %1439 = vmatprep.mubr.f32.mxu0 0.0
  %1440 = vmatmul.mubr.f32.gmra.mxu0 %v1268
  %v1441 = vpop.f32.mrf.mxu0
  %v1442 = vadd.f32 0.0, %v1441
  %v1443 = vpop.f32.mrf.mxu0
  %1444 = vmatprep.mubr.f32.mxu0 0.0
  %1445 = vmatmul.mubr.f32.gmra.mxu0 %v1271
  %v1446 = vpop.f32.mrf.mxu0
  %v1447 = vadd.f32 0.0, %v1446
  %v1448 = vpop.f32.mrf.mxu0
  %1449 = vmatprep.mubr.f32.mxu0 0.0
  %1450 = vmatmul.mubr.f32.gmra.mxu0 %v1274
  %v1451 = vpop.f32.mrf.mxu0
  %v1452 = vadd.f32 0.0, %v1451
  %v1453 = vpop.f32.mrf.mxu0
  %1454 = vmatprep.mubr.f32.mxu0 0.0
  %1455 = vmatmul.mubr.f32.gmra.mxu0 %v1277
  %v1456 = vpop.f32.mrf.mxu0
  %v1457 = vadd.f32 0.0, %v1456
  %v1458 = vpop.f32.mrf.mxu0
  %1459 = vmatprep.mubr.f32.mxu0 0.0
  %1460 = vmatmul.mubr.f32.gmra.mxu0 %v1280
  %v1461 = vpop.f32.mrf.mxu0
  %v1462 = vadd.f32 0.0, %v1461
  %v1463 = vpop.f32.mrf.mxu0
  %1464 = vmatprep.mubr.f32.mxu0 0.0
  %1465 = vmatmul.mubr.f32.gmra.mxu0 %v1283
  %v1466 = vpop.f32.mrf.mxu0
  %v1467 = vadd.f32 0.0, %v1466
  %v1468 = vpop.f32.mrf.mxu0
  %1469 = vmatprep.mubr.f32.mxu0 0.0
  %1470 = vmatmul.mubr.f32.gmra.mxu0 %v1286
  %v1471 = vpop.f32.mrf.mxu0
  %v1472 = vadd.f32 0.0, %v1471
  %v1473 = vpop.f32.mrf.mxu0
  %1474 = vmatprep.mubr.f32.mxu0 0.0
  %1475 = vmatmul.mubr.f32.gmra.mxu0 %v1289
  %v1476 = vpop.f32.mrf.mxu0
  %v1477 = vadd.f32 0.0, %v1476
  %v1478 = vpop.f32.mrf.mxu0
  %1479 = vmatprep.mubr.f32.mxu0 0.0
  %1480 = vmatmul.mubr.f32.gmra.mxu0 %v1292
  %v1481 = vpop.f32.mrf.mxu0
  %v1482 = vadd.f32 0.0, %v1481
  %v1483 = vpop.f32.mrf.mxu0
  %1484 = vmatprep.mubr.f32.mxu0 0.0
  %1485 = vmatmul.mubr.f32.gmra.mxu0 %v1295
  %v1486 = vpop.f32.mrf.mxu0
  %v1487 = vadd.f32 0.0, %v1486
  %v1488 = vpop.f32.mrf.mxu0
  %1489 = vmatprep.mubr.f32.mxu0 0.0
  %1490 = vmatmul.mubr.f32.gmra.mxu0 %v1298
  %v1491 = vpop.f32.mrf.mxu0
  %v1492 = vadd.f32 0.0, %v1491
  %v1493 = vpop.f32.mrf.mxu0
  %1494 = vmatprep.mubr.f32.mxu0 0.0
  %1495 = vmatmul.mubr.f32.gmra.mxu0 %v1301
  %v1496 = vpop.f32.mrf.mxu0
  %v1497 = vadd.f32 0.0, %v1496
  %v1498 = vpop.f32.mrf.mxu0
  %1499 = vmatprep.mubr.f32.mxu0 0.0
  %1500 = vmatmul.mubr.f32.gmra.mxu0 %v1304
  %v1501 = vpop.f32.mrf.mxu0
  %v1502 = vadd.f32 0.0, %v1501
  %v1503 = vpop.f32.mrf.mxu0
  %1504 = vmatprep.mubr.f32.mxu0 0.0
  %1505 = vmatmul.mubr.f32.gmra.mxu0 %v1307
  %v1506 = vpop.f32.mrf.mxu0
  %v1507 = vadd.f32 0.0, %v1506
  %v1508 = vpop.f32.mrf.mxu0
  %1509 = vmatprep.mubr.f32.mxu0 0.0
  %1510 = vmatmul.mubr.f32.gmra.mxu0 %v1310
  %v1511 = vpop.f32.mrf.mxu0
  %v1512 = vadd.f32 0.0, %v1511
  %v1513 = vpop.f32.mrf.mxu0
  %1514 = vmatprep.mubr.f32.mxu0 0.0
  %1515 = vmatmul.mubr.f32.gmra.mxu0 %v1313
  %v1516 = vpop.f32.mrf.mxu0
  %v1517 = vadd.f32 0.0, %v1516
  %v1518 = vpop.f32.mrf.mxu0
  %1519 = vmatprep.mubr.f32.mxu0 0.0
  %1520 = vmatmul.mubr.f32.gmra.mxu0 %v1316
  %v1521 = vpop.f32.mrf.mxu0
  %v1522 = vadd.f32 0.0, %v1521
  %v1523 = vpop.f32.mrf.mxu0
  %1524 = vmatprep.mubr.f32.mxu0 0.0
  %1525 = vmatmul.mubr.f32.gmra.mxu0 %v1319
  %v1526 = vpop.f32.mrf.mxu0
  %v1527 = vadd.f32 0.0, %v1526
  %v1528 = vpop.f32.mrf.mxu0
  %1529 = vmatprep.mubr.f32.mxu0 0.0
  %1530 = vmatmul.mubr.f32.gmra.mxu0 %v1322
  %v1531 = vpop.f32.mrf.mxu0
  %v1532 = vadd.f32 0.0, %v1531
  %v1533 = vpop.f32.mrf.mxu0
  %1534 = vmatprep.mubr.f32.mxu0 0.0
  %1535 = vmatmul.mubr.f32.gmra.mxu0 %v1325
  %v1536 = vpop.f32.mrf.mxu0
  %v1537 = vadd.f32 0.0, %v1536
  %v1538 = vpop.f32.mrf.mxu0
  %1539 = vmatprep.mubr.f32.mxu0 0.0
  %1540 = vmatmul.mubr.f32.gmra.mxu0 %v1328
  %v1541 = vpop.f32.mrf.mxu0
  %v1542 = vadd.f32 0.0, %v1541
  %v1543 = vpop.f32.mrf.mxu0
  %1544 = vmatprep.mubr.f32.mxu0 0.0
  %1545 = vmatmul.mubr.f32.gmra.mxu0 %v1331
  %v1546 = vpop.f32.mrf.mxu0
  %v1547 = vadd.f32 0.0, %v1546
  %v1548 = vpop.f32.mrf.mxu0
  %1549 = vmatprep.mubr.f32.mxu0 0.0
  %1550 = vmatmul.mubr.f32.gmra.mxu0 %v1334
  %v1551 = vpop.f32.mrf.mxu0
  %v1552 = vadd.f32 0.0, %v1551
  %v1553 = vpop.f32.mrf.mxu0
  %1554 = vmatprep.mubr.f32.mxu0 0.0
  %1555 = vmatmul.mubr.f32.gmra.mxu0 %v1337
  %v1556 = vpop.f32.mrf.mxu0
  %v1557 = vadd.f32 0.0, %v1556
  %v1558 = vpop.f32.mrf.mxu0
  %1559 = vmatprep.mubr.f32.mxu0 0.0
  %1560 = vmatmul.mubr.f32.gmra.mxu0 %v1340
  %v1561 = vpop.f32.mrf.mxu0
  %v1562 = vadd.f32 0.0, %v1561
  %v1563 = vpop.f32.mrf.mxu0
  %1564 = vmatprep.mubr.f32.mxu0 0.0
  %1565 = vmatmul.mubr.f32.gmra.mxu0 %v1343
  %v1566 = vpop.f32.mrf.mxu0
  %v1567 = vadd.f32 0.0, %v1566
  %v1568 = vpop.f32.mrf.mxu0
  %1569 = vmatprep.mubr.f32.mxu0 0.0
  %1570 = vmatmul.mubr.f32.gmra.mxu0 %v1346
  %v1571 = vpop.f32.mrf.mxu0
  %v1572 = vadd.f32 0.0, %v1571
  %v1573 = vpop.f32.mrf.mxu0
  %1574 = vmatprep.mubr.f32.mxu0 0.0
  %1575 = vmatmul.mubr.f32.gmra.mxu0 %v1349
  %v1576 = vpop.f32.mrf.mxu0
  %v1577 = vadd.f32 0.0, %v1576
  %v1578 = vpop.f32.mrf.mxu0
  %1579 = vmatprep.mubr.f32.mxu0 0.0
  %1580 = vmatmul.mubr.f32.gmra.mxu0 %v1352
  %v1581 = vpop.f32.mrf.mxu0
  %v1582 = vadd.f32 0.0, %v1581
  %v1583 = vpop.f32.mrf.mxu0
  %1584 = vmatprep.mubr.f32.mxu0 0.0
  %1585 = vmatmul.mubr.f32.gmra.mxu0 %v1355
  %v1586 = vpop.f32.mrf.mxu0
  %v1587 = vadd.f32 0.0, %v1586
  %v1588 = vpop.f32.mrf.mxu0
  %1589 = vmatprep.mubr.f32.mxu0 0.0
  %1590 = vmatmul.mubr.f32.gmra.mxu0 %v1358
  %v1591 = vpop.f32.mrf.mxu0
  %v1592 = vadd.f32 0.0, %v1591
  %v1593 = vpop.f32.mrf.mxu0
  %1594 = vmatprep.mubr.f32.mxu0 0.0
  %1595 = vmatmul.mubr.f32.gmra.mxu0 %v1361
  %v1596 = vpop.f32.mrf.mxu0
  %v1597 = vadd.f32 0.0, %v1596
  %v1598 = vpop.f32.mrf.mxu0
  %1599 = vmatprep.mubr.f32.mxu0 0.0
  %1600 = vmatmul.mubr.f32.gmra.mxu0 %v1364
  %v1601 = vpop.f32.mrf.mxu0
  %v1602 = vadd.f32 0.0, %v1601
  %v1603 = vpop.f32.mrf.mxu0
  %1604 = vmatprep.mubr.f32.mxu0 0.0
  %1605 = vmatmul.mubr.f32.gmra.mxu0 %v1367
  %v1606 = vpop.f32.mrf.mxu0
  %v1607 = vadd.f32 0.0, %v1606
  %v1608 = vpop.f32.mrf.mxu0
  %1609 = vmatprep.mubr.f32.mxu0 0.0
  %1610 = vmatmul.mubr.f32.gmra.mxu0 %v1370
  %v1611 = vpop.f32.mrf.mxu0
  %v1612 = vadd.f32 0.0, %v1611
  %v1613 = vpop.f32.mrf.mxu0
  %1614 = vmatprep.mubr.f32.mxu0 0.0
  %1615 = vmatmul.mubr.f32.gmra.mxu0 %v1373
  %v1616 = vpop.f32.mrf.mxu0
  %v1617 = vadd.f32 0.0, %v1616
  %v1618 = vpop.f32.mrf.mxu0
  %1619 = vdwg.mxu0
  %v1620 = vmax.f32 %v1053, %v1442
  %v1621 = vmax.f32 %v1058, %v1447
  %v1622 = vmax.f32 %v1063, %v1452
  %v1623 = vmax.f32 %v1068, %v1457
  %v1624 = vmax.f32 %v1073, %v1462
  %v1625 = vmax.f32 %v1078, %v1467
  %v1626 = vmax.f32 %v1083, %v1472
  %v1627 = vmax.f32 %v1088, %v1477
  %v1628 = vmax.f32 %v1093, %v1482
  %v1629 = vmax.f32 %v1098, %v1487
  %v1630 = vmax.f32 %v1103, %v1492
  %v1631 = vmax.f32 %v1108, %v1497
  %v1632 = vmax.f32 %v1113, %v1502
  %v1633 = vmax.f32 %v1118, %v1507
  %v1634 = vmax.f32 %v1123, %v1512
  %v1635 = vmax.f32 %v1128, %v1517
  %v1636 = vmax.f32 %v1133, %v1522
  %v1637 = vmax.f32 %v1138, %v1527
  %v1638 = vmax.f32 %v1143, %v1532
  %v1639 = vmax.f32 %v1148, %v1537
  %v1640 = vmax.f32 %v1153, %v1542
  %v1641 = vmax.f32 %v1158, %v1547
  %v1642 = vmax.f32 %v1163, %v1552
  %v1643 = vmax.f32 %v1168, %v1557
  %v1644 = vmax.f32 %v1173, %v1562
  %v1645 = vmax.f32 %v1178, %v1567
  %v1646 = vmax.f32 %v1183, %v1572
  %v1647 = vmax.f32 %v1188, %v1577
  %v1648 = vmax.f32 %v1193, %v1582
  %v1649 = vmax.f32 %v1198, %v1587
  %v1650 = vmax.f32 %v1203, %v1592
  %v1651 = vmax.f32 %v1208, %v1597
  %v1652 = vmax.f32 %v1213, %v1602
  %v1653 = vmax.f32 %v1218, %v1607
  %v1654 = vmax.f32 %v1223, %v1612
  %v1655 = vmax.f32 %v1228, %v1617
  %v1656 = vmax.f32 %v806, %v1620
  %v1657 = vmax.f32 %v807, %v1621
  %v1658 = vmax.f32 %v808, %v1622
  %v1659 = vmax.f32 %v809, %v1623
  %v1660 = vmax.f32 %v810, %v1624
  %v1661 = vmax.f32 %v811, %v1625
  %v1662 = vmax.f32 %v812, %v1626
  %v1663 = vmax.f32 %v813, %v1627
  %v1664 = vmax.f32 %v814, %v1628
  %v1665 = vmax.f32 %v815, %v1629
  %v1666 = vmax.f32 %v816, %v1630
  %v1667 = vmax.f32 %v817, %v1631
  %v1668 = vmax.f32 %v818, %v1632
  %v1669 = vmax.f32 %v819, %v1633
  %v1670 = vmax.f32 %v820, %v1634
  %v1671 = vmax.f32 %v821, %v1635
  %v1672 = vmax.f32 %v822, %v1636
  %v1673 = vmax.f32 %v823, %v1637
  %v1674 = vmax.f32 %v824, %v1638
  %v1675 = vmax.f32 %v825, %v1639
  %v1676 = vmax.f32 %v826, %v1640
  %v1677 = vmax.f32 %v827, %v1641
  %v1678 = vmax.f32 %v828, %v1642
  %v1679 = vmax.f32 %v829, %v1643
  %v1680 = vmax.f32 %v830, %v1644
  %v1681 = vmax.f32 %v831, %v1645
  %v1682 = vmax.f32 %v832, %v1646
  %v1683 = vmax.f32 %v833, %v1647
  %v1684 = vmax.f32 %v834, %v1648
  %v1685 = vmax.f32 %v835, %v1649
  %v1686 = vmax.f32 %v836, %v1650
  %v1687 = vmax.f32 %v837, %v1651
  %v1688 = vmax.f32 %v838, %v1652
  %v1689 = vmax.f32 %v839, %v1653
  %v1690 = vmax.f32 %v840, %v1654
  %v1691 = vmax.f32 %v841, %v1655
  %v1692 = vld [vmem:[%s5] sm:$0x1]
  %v1694 = vlaneseq
  %v1695 = vshrl.u32 %v1694, 7
  %v1696 = vsub.s32 0, %v1695
  %v1697 = vrot.slane %v1692, %v1696
  %v1699 = vadd.f32 %v1656, %v1697
  %v1700 = vadd.f32 %v1657, %v1697
  %v1701 = vadd.f32 %v1658, %v1697
  %v1702 = vadd.f32 %v1659, %v1697
  %v1703 = vadd.f32 %v1660, %v1697
  %v1704 = vadd.f32 %v1661, %v1697
  %v1705 = vadd.f32 %v1662, %v1697
  %v1706 = vadd.f32 %v1663, %v1697
  %v1707 = vadd.f32 %v1664, %v1697
  %v1708 = vadd.f32 %v1665, %v1697
  %v1709 = vadd.f32 %v1666, %v1697
  %v1710 = vadd.f32 %v1667, %v1697
  %v1711 = vadd.f32 %v1668, %v1697
  %v1712 = vadd.f32 %v1669, %v1697
  %v1713 = vadd.f32 %v1670, %v1697
  %v1714 = vadd.f32 %v1671, %v1697
  %v1715 = vadd.f32 %v1672, %v1697
  %v1716 = vadd.f32 %v1673, %v1697
  %v1717 = vadd.f32 %v1674, %v1697
  %v1718 = vadd.f32 %v1675, %v1697
  %v1719 = vadd.f32 %v1676, %v1697
  %v1720 = vadd.f32 %v1677, %v1697
  %v1721 = vadd.f32 %v1678, %v1697
  %v1722 = vadd.f32 %v1679, %v1697
  %v1723 = vadd.f32 %v1680, %v1697
  %v1724 = vadd.f32 %v1681, %v1697
  %v1725 = vadd.f32 %v1682, %v1697
  %v1726 = vadd.f32 %v1683, %v1697
  %v1727 = vadd.f32 %v1684, %v1697
  %v1728 = vadd.f32 %v1685, %v1697
  %v1729 = vadd.f32 %v1686, %v1697
  %v1730 = vadd.f32 %v1687, %v1697
  %v1731 = vadd.f32 %v1688, %v1697
  %v1732 = vadd.f32 %v1689, %v1697
  %v1733 = vadd.f32 %v1690, %v1697
  %v1734 = vadd.f32 %v1691, %v1697
  %v1735 = vmax.f32 %v1699, 0.0
  %v1736 = vmax.f32 %v1700, 0.0
  %v1737 = vmax.f32 %v1701, 0.0
  %v1738 = vmax.f32 %v1702, 0.0
  %v1739 = vmax.f32 %v1703, 0.0
  %v1740 = vmax.f32 %v1704, 0.0
  %v1741 = vmax.f32 %v1705, 0.0
  %v1742 = vmax.f32 %v1706, 0.0
  %v1743 = vmax.f32 %v1707, 0.0
  %v1744 = vmax.f32 %v1708, 0.0
  %v1745 = vmax.f32 %v1709, 0.0
  %v1746 = vmax.f32 %v1710, 0.0
  %v1747 = vmax.f32 %v1711, 0.0
  %v1748 = vmax.f32 %v1712, 0.0
  %v1749 = vmax.f32 %v1713, 0.0
  %v1750 = vmax.f32 %v1714, 0.0
  %v1751 = vmax.f32 %v1715, 0.0
  %v1752 = vmax.f32 %v1716, 0.0
  %v1753 = vmax.f32 %v1717, 0.0
  %v1754 = vmax.f32 %v1718, 0.0
  %v1755 = vmax.f32 %v1719, 0.0
  %v1756 = vmax.f32 %v1720, 0.0
  %v1757 = vmax.f32 %v1721, 0.0
  %v1758 = vmax.f32 %v1722, 0.0
  %v1759 = vmax.f32 %v1723, 0.0
  %v1760 = vmax.f32 %v1724, 0.0
  %v1761 = vmax.f32 %v1725, 0.0
  %v1762 = vmax.f32 %v1726, 0.0
  %v1763 = vmax.f32 %v1727, 0.0
  %v1764 = vmax.f32 %v1728, 0.0
  %v1765 = vmax.f32 %v1729, 0.0
  %v1766 = vmax.f32 %v1730, 0.0
  %v1767 = vmax.f32 %v1731, 0.0
  %v1768 = vmax.f32 %v1732, 0.0
  %v1769 = vmax.f32 %v1733, 0.0
  %v1770 = vmax.f32 %v1734, 0.0
  %vm1771 = vcmask 80896
  %1772 = vst.msk [vmem:[%s6] sm:$0xff] %vm1771, %v1735
  %1773 = vst.msk [vmem:[%s6 + $0x8] sm:$0xff] %vm1771, %v1736
  %1774 = vst.msk [vmem:[%s6 + $0x10] sm:$0xff] %vm1771, %v1737
  %1775 = vst.msk [vmem:[%s6 + $0x18] sm:$0xff] %vm1771, %v1738
  %1776 = vst.msk [vmem:[%s6 + $0x20] sm:$0xff] %vm1771, %v1739
  %1777 = vst.msk [vmem:[%s6 + $0x28] sm:$0xff] %vm1771, %v1740
  %1778 = vst.msk [vmem:[%s6 + $0x30] sm:$0xff] %vm1771, %v1741
  %1779 = vst.msk [vmem:[%s6 + $0x38] sm:$0xff] %vm1771, %v1742
  %1780 = vst.msk [vmem:[%s6 + $0x40] sm:$0xff] %vm1771, %v1743
  %1781 = vst.msk [vmem:[%s6 + $0x48] sm:$0xff] %vm1771, %v1744
  %1782 = vst.msk [vmem:[%s6 + $0x50] sm:$0xff] %vm1771, %v1745
  %1783 = vst.msk [vmem:[%s6 + $0x58] sm:$0xff] %vm1771, %v1746
  %1784 = vst.msk [vmem:[%s6 + $0x60] sm:$0xff] %vm1771, %v1747
  %1785 = vst.msk [vmem:[%s6 + $0x68] sm:$0xff] %vm1771, %v1748
  %1786 = vst.msk [vmem:[%s6 + $0x70] sm:$0xff] %vm1771, %v1749
  %1787 = vst.msk [vmem:[%s6 + $0x78] sm:$0xff] %vm1771, %v1750
  %1788 = vst.msk [vmem:[%s6 + $0x80] sm:$0xff] %vm1771, %v1751
  %1789 = vst.msk [vmem:[%s6 + $0x88] sm:$0xff] %vm1771, %v1752
  %1790 = vst.msk [vmem:[%s6 + $0x90] sm:$0xff] %vm1771, %v1753
  %1791 = vst.msk [vmem:[%s6 + $0x98] sm:$0xff] %vm1771, %v1754
  %1792 = vst.msk [vmem:[%s6 + $0xa0] sm:$0xff] %vm1771, %v1755
  %1793 = vst.msk [vmem:[%s6 + $0xa8] sm:$0xff] %vm1771, %v1756
  %1794 = vst.msk [vmem:[%s6 + $0xb0] sm:$0xff] %vm1771, %v1757
  %1795 = vst.msk [vmem:[%s6 + $0xb8] sm:$0xff] %vm1771, %v1758
  %1796 = vst.msk [vmem:[%s6 + $0xc0] sm:$0xff] %vm1771, %v1759
  %1797 = vst.msk [vmem:[%s6 + $0xc8] sm:$0xff] %vm1771, %v1760
  %1798 = vst.msk [vmem:[%s6 + $0xd0] sm:$0xff] %vm1771, %v1761
  %1799 = vst.msk [vmem:[%s6 + $0xd8] sm:$0xff] %vm1771, %v1762
  %1800 = vst.msk [vmem:[%s6 + $0xe0] sm:$0xff] %vm1771, %v1763
  %1801 = vst.msk [vmem:[%s6 + $0xe8] sm:$0xff] %vm1771, %v1764
  %1802 = vst.msk [vmem:[%s6 + $0xf0] sm:$0xff] %vm1771, %v1765
  %1803 = vst.msk [vmem:[%s6 + $0xf8] sm:$0xff] %vm1771, %v1766
  %1804 = vst.msk [vmem:[%s6 + $0x100] sm:$0xff] %vm1771, %v1767
  %1805 = vst.msk [vmem:[%s6 + $0x108] sm:$0xff] %vm1771, %v1768
  %1806 = vst.msk [vmem:[%s6 + $0x110] sm:$0xff] %vm1771, %v1769
  %1807 = vst.msk [vmem:[%s6 + $0x118] sm:$0xff] %vm1771, %v1770
  // Predicated region
  $region26: #{mnist_forward.3} parent=0 // pred_check
    _
  $region27: #{mnist_forward.3} parent=0 // pred_check_branch
    %1809 = sbr.rel (0) target = $region29
  $region28: #{mnist_forward.3} parent=0 // pred_region
    _
  $region29: #{mnist_forward.3} parent=0 // pred_fallthru
    _
  // Predicated region
  $region30: #{mnist_forward.3} parent=0 // pred_check
    _
  $region31: #{mnist_forward.3} parent=0 // pred_check_branch
    %1811 = sbr.rel (0) target = $region33
  $region32: #{mnist_forward.3} parent=0 // pred_region
    _
  $region33: #{mnist_forward.3} parent=0 // pred_fallthru
    _

// kernel: mnist_forward.4
$region0: #{mnist_forward.4}
  #allocation0 [shape = 'u32[]', space=smem, size = 0x4, offset = 0x4, fixed_abs, tag = 'smem constant byte address 0x4 - core index']
  #allocation1 [shape = 'u32[144,128]{1,0:T(1,128)}', space=vmem, size = 0x12000, scoped, tag = 'internal scratch']
  %s0 = inlined_call_operand.vmem [shape: f32[32,256], index: 0, kind: input, shape index: {}]
  %s1 = inlined_call_operand.vmem [shape: f32[32,256], index: 1, kind: input, shape index: {}]
  %s2 = inlined_call_operand.vmem [shape: f32[32,256], index: 2, kind: input, shape index: {}]
  %s3 = inlined_call_operand.vmem [shape: f32[32,256], index: 3, kind: input, shape index: {}]
  %s4 = inlined_call_operand.vmem [shape: f32[256,20], index: 4, kind: input, shape index: {}]
  %s5 = inlined_call_operand.vmem [shape: f32[1,20], index: 5, kind: input, shape index: {}]
  %s6 = inlined_call_operand.vmem [shape: f32[32,20], index: 6, kind: output, shape index: {}]
  %s7 = sld [smem:[#allocation0]]
  $region34: #{mnist_forward.4} parent=0
    _
  %s9 = ssub.s32 1, %s7
  %s10 = scalar_select 0, %s9, %s7
  // Predicated region
  $region2: #{mnist_forward.4} parent=0 // pred_check
    _
  $region3: #{mnist_forward.4} parent=0 // pred_check_branch
    %12 = sbr.rel (0) target = $region5
  $region4: #{mnist_forward.4} parent=0 // pred_region
    _
  $region5: #{mnist_forward.4} parent=0 // pred_fallthru
    _
  // Predicated region
  $region6: #{mnist_forward.4} parent=0 // pred_check
    _
  $region7: #{mnist_forward.4} parent=0 // pred_check_branch
    %14 = sbr.rel (0) target = $region9
  $region8: #{mnist_forward.4} parent=0 // pred_region
    _
  $region9: #{mnist_forward.4} parent=0 // pred_fallthru
    _
  // Predicated region
  $region10: #{mnist_forward.4} parent=0 // pred_check
    _
  $region11: #{mnist_forward.4} parent=0 // pred_check_branch
    %16 = sbr.rel (0) target = $region13
  $region12: #{mnist_forward.4} parent=0 // pred_region
    _
  $region13: #{mnist_forward.4} parent=0 // pred_fallthru
    _
  // Predicated region
  $region14: #{mnist_forward.4} parent=0 // pred_check
    _
  $region15: #{mnist_forward.4} parent=0 // pred_check_branch
    %18 = sbr.rel (0) target = $region17
  $region16: #{mnist_forward.4} parent=0 // pred_region
    _
  $region17: #{mnist_forward.4} parent=0 // pred_fallthru
    _
  // Predicated region
  $region18: #{mnist_forward.4} parent=0 // pred_check
    _
  $region19: #{mnist_forward.4} parent=0 // pred_check_branch
    %20 = sbr.rel (0) target = $region21
  $region20: #{mnist_forward.4} parent=0 // pred_region
    _
  $region21: #{mnist_forward.4} parent=0 // pred_fallthru
    _
  // Predicated region
  $region22: #{mnist_forward.4} parent=0 // pred_check
    _
  $region23: #{mnist_forward.4} parent=0 // pred_check_branch
    %22 = sbr.rel (0) target = $region25
  $region24: #{mnist_forward.4} parent=0 // pred_region
    _
  $region25: #{mnist_forward.4} parent=0 // pred_fallthru
    _
  %v23 = vld [vmem:[%s4] sm:$0xff]
  %v24 = vld [vmem:[%s4 + $0x8] sm:$0xff]
  %v25 = vld [vmem:[%s4 + $0x10] sm:$0xff]
  %v26 = vld [vmem:[%s4 + $0x18] sm:$0xff]
  %v27 = vld [vmem:[%s4 + $0x20] sm:$0xff]
  %v28 = vld [vmem:[%s4 + $0x28] sm:$0xff]
  %v29 = vld [vmem:[%s4 + $0x30] sm:$0xff]
  %v30 = vld [vmem:[%s4 + $0x38] sm:$0xff]
  %v31 = vld [vmem:[%s4 + $0x40] sm:$0xff]
  %v32 = vld [vmem:[%s4 + $0x48] sm:$0xff]
  %v33 = vld [vmem:[%s4 + $0x50] sm:$0xff]
  %v34 = vld [vmem:[%s4 + $0x58] sm:$0xff]
  %v35 = vld [vmem:[%s4 + $0x60] sm:$0xff]
  %v36 = vld [vmem:[%s4 + $0x68] sm:$0xff]
  %v37 = vld [vmem:[%s4 + $0x70] sm:$0xff]
  %v38 = vld [vmem:[%s4 + $0x78] sm:$0xff]
  %v39 = vld [vmem:[%s4 + $0x80] sm:$0xff]
  %v40 = vld [vmem:[%s4 + $0x88] sm:$0xff]
  %v41 = vld [vmem:[%s4 + $0x90] sm:$0xff]
  %v42 = vld [vmem:[%s4 + $0x98] sm:$0xff]
  %v43 = vld [vmem:[%s4 + $0xa0] sm:$0xff]
  %v44 = vld [vmem:[%s4 + $0xa8] sm:$0xff]
  %v45 = vld [vmem:[%s4 + $0xb0] sm:$0xff]
  %v46 = vld [vmem:[%s4 + $0xb8] sm:$0xff]
  %v47 = vld [vmem:[%s4 + $0xc0] sm:$0xff]
  %v48 = vld [vmem:[%s4 + $0xc8] sm:$0xff]
  %v49 = vld [vmem:[%s4 + $0xd0] sm:$0xff]
  %v50 = vld [vmem:[%s4 + $0xd8] sm:$0xff]
  %v51 = vld [vmem:[%s4 + $0xe0] sm:$0xff]
  %v52 = vld [vmem:[%s4 + $0xe8] sm:$0xff]
  %v53 = vld [vmem:[%s4 + $0xf0] sm:$0xff]
  %v54 = vld [vmem:[%s4 + $0xf8] sm:$0xff]
  %v55 = vld [vmem:[%s0] sm:$0xff]
  %v56 = vld [vmem:[%s0 + $0x8] sm:$0xff]
  %v57 = vld [vmem:[%s0 + $0x10] sm:$0xff]
  %v58 = vld [vmem:[%s0 + $0x18] sm:$0xff]
  %v59 = vld [vmem:[%s0 + $0x20] sm:$0xff]
  %v60 = vld [vmem:[%s0 + $0x28] sm:$0xff]
  %v61 = vld [vmem:[%s0 + $0x30] sm:$0xff]
  %v62 = vld [vmem:[%s0 + $0x38] sm:$0xff]
  %63 = vmatprep.subr.mxu0 0.0
  %64 = vmatpush1.msra.mxu0 %v38
  %65 = vmatprep.subr.mxu0 0.0
  %66 = vmatpush1.msra.mxu0 %v37
  %67 = vmatprep.subr.mxu0 0.0
  %68 = vmatpush1.msra.mxu0 %v36
  %69 = vmatprep.subr.mxu0 0.0
  %70 = vmatpush1.msra.mxu0 %v35
  %71 = vmatprep.subr.mxu0 0.0
  %72 = vmatpush1.msra.mxu0 %v34
  %73 = vmatprep.subr.mxu0 0.0
  %74 = vmatpush1.msra.mxu0 %v33
  %75 = vmatprep.subr.mxu0 0.0
  %76 = vmatpush1.msra.mxu0 %v32
  %77 = vmatprep.subr.mxu0 0.0
  %78 = vmatpush1.msra.mxu0 %v31
  %79 = vmatprep.subr.mxu0 0.0
  %80 = vmatpush1.msra.mxu0 %v30
  %81 = vmatprep.subr.mxu0 0.0
  %82 = vmatpush1.msra.mxu0 %v29
  %83 = vmatprep.subr.mxu0 0.0
  %84 = vmatpush1.msra.mxu0 %v28
  %85 = vmatprep.subr.mxu0 0.0
  %86 = vmatpush1.msra.mxu0 %v27
  %87 = vmatprep.subr.mxu0 0.0
  %88 = vmatpush1.msra.mxu0 %v26
  %89 = vmatprep.subr.mxu0 0.0
  %90 = vmatpush1.msra.mxu0 %v25
  %91 = vmatprep.subr.mxu0 0.0
  %92 = vmatpush1.msra.mxu0 %v24
  %93 = vmatprep.subr.mxu0 0.0
  %94 = vmatpush1.msra.mxu0 %v23
  %95 = vmatprep.subr.mxu0 0.0
  %96 = vmatpush2.msra.mxu0 %v54
  %97 = vmatprep.subr.mxu0 0.0
  %98 = vmatpush2.msra.mxu0 %v53
  %99 = vmatprep.subr.mxu0 0.0
  %100 = vmatpush2.msra.mxu0 %v52
  %101 = vmatprep.subr.mxu0 0.0
  %102 = vmatpush2.msra.mxu0 %v51
  %103 = vmatprep.subr.mxu0 0.0
  %104 = vmatpush2.msra.mxu0 %v50
  %105 = vmatprep.subr.mxu0 0.0
  %106 = vmatpush2.msra.mxu0 %v49
  %107 = vmatprep.subr.mxu0 0.0
  %108 = vmatpush2.msra.mxu0 %v48
  %109 = vmatprep.subr.mxu0 0.0
  %110 = vmatpush2.msra.mxu0 %v47
  %111 = vmatprep.subr.mxu0 0.0
  %112 = vmatpush2.msra.mxu0 %v46
  %113 = vmatprep.subr.mxu0 0.0
  %114 = vmatpush2.msra.mxu0 %v45
  %115 = vmatprep.subr.mxu0 0.0
  %116 = vmatpush2.msra.mxu0 %v44
  %117 = vmatprep.subr.mxu0 0.0
  %118 = vmatpush2.msra.mxu0 %v43
  %119 = vmatprep.subr.mxu0 0.0
  %120 = vmatpush2.msra.mxu0 %v42
  %121 = vmatprep.subr.mxu0 0.0
  %122 = vmatpush2.msra.mxu0 %v41
  %123 = vmatprep.subr.mxu0 0.0
  %124 = vmatpush2.msra.mxu0 %v40
  %125 = vmatprep.subr.mxu0 0.0
  %126 = vmatpush2.msra.mxu0 %v39
  %127 = vmatprep.mubr.f32.mxu0 %v56
  %128 = vmatmul.mubr.f32.gmra.mxu0 %v55
  %v129 = vpop.f32.mrf.mxu0
  %v130 = vadd.f32 0.0, %v129
  %v131 = vpop.f32.mrf.mxu0
  %132 = vmatprep.mubr.f32.mxu0 %v58
  %133 = vmatmul.mubr.f32.gmra.mxu0 %v57
  %v134 = vpop.f32.mrf.mxu0
  %v135 = vadd.f32 0.0, %v134
  %v136 = vpop.f32.mrf.mxu0
  %137 = vmatprep.mubr.f32.mxu0 %v60
  %138 = vmatmul.mubr.f32.gmra.mxu0 %v59
  %v139 = vpop.f32.mrf.mxu0
  %v140 = vadd.f32 0.0, %v139
  %v141 = vpop.f32.mrf.mxu0
  %142 = vmatprep.mubr.f32.mxu0 %v62
  %143 = vmatmul.mubr.f32.gmra.mxu0 %v61
  %v144 = vpop.f32.mrf.mxu0
  %v145 = vadd.f32 0.0, %v144
  %v146 = vpop.f32.mrf.mxu0
  %147 = vdwg.mxu0
  %v148 = vld [vmem:[%s1] sm:$0xff]
  %v149 = vld [vmem:[%s1 + $0x8] sm:$0xff]
  %v150 = vld [vmem:[%s1 + $0x10] sm:$0xff]
  %v151 = vld [vmem:[%s1 + $0x18] sm:$0xff]
  %v152 = vld [vmem:[%s1 + $0x20] sm:$0xff]
  %v153 = vld [vmem:[%s1 + $0x28] sm:$0xff]
  %v154 = vld [vmem:[%s1 + $0x30] sm:$0xff]
  %v155 = vld [vmem:[%s1 + $0x38] sm:$0xff]
  %156 = vmatprep.subr.mxu0 0.0
  %157 = vmatpush1.msra.mxu0 %v38
  %158 = vmatprep.subr.mxu0 0.0
  %159 = vmatpush1.msra.mxu0 %v37
  %160 = vmatprep.subr.mxu0 0.0
  %161 = vmatpush1.msra.mxu0 %v36
  %162 = vmatprep.subr.mxu0 0.0
  %163 = vmatpush1.msra.mxu0 %v35
  %164 = vmatprep.subr.mxu0 0.0
  %165 = vmatpush1.msra.mxu0 %v34
  %166 = vmatprep.subr.mxu0 0.0
  %167 = vmatpush1.msra.mxu0 %v33
  %168 = vmatprep.subr.mxu0 0.0
  %169 = vmatpush1.msra.mxu0 %v32
  %170 = vmatprep.subr.mxu0 0.0
  %171 = vmatpush1.msra.mxu0 %v31
  %172 = vmatprep.subr.mxu0 0.0
  %173 = vmatpush1.msra.mxu0 %v30
  %174 = vmatprep.subr.mxu0 0.0
  %175 = vmatpush1.msra.mxu0 %v29
  %176 = vmatprep.subr.mxu0 0.0
  %177 = vmatpush1.msra.mxu0 %v28
  %178 = vmatprep.subr.mxu0 0.0
  %179 = vmatpush1.msra.mxu0 %v27
  %180 = vmatprep.subr.mxu0 0.0
  %181 = vmatpush1.msra.mxu0 %v26
  %182 = vmatprep.subr.mxu0 0.0
  %183 = vmatpush1.msra.mxu0 %v25
  %184 = vmatprep.subr.mxu0 0.0
  %185 = vmatpush1.msra.mxu0 %v24
  %186 = vmatprep.subr.mxu0 0.0
  %187 = vmatpush1.msra.mxu0 %v23
  %188 = vmatprep.subr.mxu0 0.0
  %189 = vmatpush2.msra.mxu0 %v54
  %190 = vmatprep.subr.mxu0 0.0
  %191 = vmatpush2.msra.mxu0 %v53
  %192 = vmatprep.subr.mxu0 0.0
  %193 = vmatpush2.msra.mxu0 %v52
  %194 = vmatprep.subr.mxu0 0.0
  %195 = vmatpush2.msra.mxu0 %v51
  %196 = vmatprep.subr.mxu0 0.0
  %197 = vmatpush2.msra.mxu0 %v50
  %198 = vmatprep.subr.mxu0 0.0
  %199 = vmatpush2.msra.mxu0 %v49
  %200 = vmatprep.subr.mxu0 0.0
  %201 = vmatpush2.msra.mxu0 %v48
  %202 = vmatprep.subr.mxu0 0.0
  %203 = vmatpush2.msra.mxu0 %v47
  %204 = vmatprep.subr.mxu0 0.0
  %205 = vmatpush2.msra.mxu0 %v46
  %206 = vmatprep.subr.mxu0 0.0
  %207 = vmatpush2.msra.mxu0 %v45
  %208 = vmatprep.subr.mxu0 0.0
  %209 = vmatpush2.msra.mxu0 %v44
  %210 = vmatprep.subr.mxu0 0.0
  %211 = vmatpush2.msra.mxu0 %v43
  %212 = vmatprep.subr.mxu0 0.0
  %213 = vmatpush2.msra.mxu0 %v42
  %214 = vmatprep.subr.mxu0 0.0
  %215 = vmatpush2.msra.mxu0 %v41
  %216 = vmatprep.subr.mxu0 0.0
  %217 = vmatpush2.msra.mxu0 %v40
  %218 = vmatprep.subr.mxu0 0.0
  %219 = vmatpush2.msra.mxu0 %v39
  %220 = vmatprep.mubr.f32.mxu0 %v149
  %221 = vmatmul.mubr.f32.gmra.mxu0 %v148
  %v222 = vpop.f32.mrf.mxu0
  %v223 = vadd.f32 0.0, %v222
  %v224 = vpop.f32.mrf.mxu0
  %225 = vmatprep.mubr.f32.mxu0 %v151
  %226 = vmatmul.mubr.f32.gmra.mxu0 %v150
  %v227 = vpop.f32.mrf.mxu0
  %v228 = vadd.f32 0.0, %v227
  %v229 = vpop.f32.mrf.mxu0
  %230 = vmatprep.mubr.f32.mxu0 %v153
  %231 = vmatmul.mubr.f32.gmra.mxu0 %v152
  %v232 = vpop.f32.mrf.mxu0
  %v233 = vadd.f32 0.0, %v232
  %v234 = vpop.f32.mrf.mxu0
  %235 = vmatprep.mubr.f32.mxu0 %v155
  %236 = vmatmul.mubr.f32.gmra.mxu0 %v154
  %v237 = vpop.f32.mrf.mxu0
  %v238 = vadd.f32 0.0, %v237
  %v239 = vpop.f32.mrf.mxu0
  %240 = vdwg.mxu0
  %v241 = vmax.f32 %v130, %v223
  %v242 = vmax.f32 %v135, %v228
  %v243 = vmax.f32 %v140, %v233
  %v244 = vmax.f32 %v145, %v238
  %v245 = vld [vmem:[%s2] sm:$0xff]
  %v246 = vld [vmem:[%s2 + $0x8] sm:$0xff]
  %v247 = vld [vmem:[%s2 + $0x10] sm:$0xff]
  %v248 = vld [vmem:[%s2 + $0x18] sm:$0xff]
  %v249 = vld [vmem:[%s2 + $0x20] sm:$0xff]
  %v250 = vld [vmem:[%s2 + $0x28] sm:$0xff]
  %v251 = vld [vmem:[%s2 + $0x30] sm:$0xff]
  %v252 = vld [vmem:[%s2 + $0x38] sm:$0xff]
  %253 = vmatprep.subr.mxu0 0.0
  %254 = vmatpush1.msra.mxu0 %v38
  %255 = vmatprep.subr.mxu0 0.0
  %256 = vmatpush1.msra.mxu0 %v37
  %257 = vmatprep.subr.mxu0 0.0
  %258 = vmatpush1.msra.mxu0 %v36
  %259 = vmatprep.subr.mxu0 0.0
  %260 = vmatpush1.msra.mxu0 %v35
  %261 = vmatprep.subr.mxu0 0.0
  %262 = vmatpush1.msra.mxu0 %v34
  %263 = vmatprep.subr.mxu0 0.0
  %264 = vmatpush1.msra.mxu0 %v33
  %265 = vmatprep.subr.mxu0 0.0
  %266 = vmatpush1.msra.mxu0 %v32
  %267 = vmatprep.subr.mxu0 0.0
  %268 = vmatpush1.msra.mxu0 %v31
  %269 = vmatprep.subr.mxu0 0.0
  %270 = vmatpush1.msra.mxu0 %v30
  %271 = vmatprep.subr.mxu0 0.0
  %272 = vmatpush1.msra.mxu0 %v29
  %273 = vmatprep.subr.mxu0 0.0
  %274 = vmatpush1.msra.mxu0 %v28
  %275 = vmatprep.subr.mxu0 0.0
  %276 = vmatpush1.msra.mxu0 %v27
  %277 = vmatprep.subr.mxu0 0.0
  %278 = vmatpush1.msra.mxu0 %v26
  %279 = vmatprep.subr.mxu0 0.0
  %280 = vmatpush1.msra.mxu0 %v25
  %281 = vmatprep.subr.mxu0 0.0
  %282 = vmatpush1.msra.mxu0 %v24
  %283 = vmatprep.subr.mxu0 0.0
  %284 = vmatpush1.msra.mxu0 %v23
  %285 = vmatprep.subr.mxu0 0.0
  %286 = vmatpush2.msra.mxu0 %v54
  %287 = vmatprep.subr.mxu0 0.0
  %288 = vmatpush2.msra.mxu0 %v53
  %289 = vmatprep.subr.mxu0 0.0
  %290 = vmatpush2.msra.mxu0 %v52
  %291 = vmatprep.subr.mxu0 0.0
  %292 = vmatpush2.msra.mxu0 %v51
  %293 = vmatprep.subr.mxu0 0.0
  %294 = vmatpush2.msra.mxu0 %v50
  %295 = vmatprep.subr.mxu0 0.0
  %296 = vmatpush2.msra.mxu0 %v49
  %297 = vmatprep.subr.mxu0 0.0
  %298 = vmatpush2.msra.mxu0 %v48
  %299 = vmatprep.subr.mxu0 0.0
  %300 = vmatpush2.msra.mxu0 %v47
  %301 = vmatprep.subr.mxu0 0.0
  %302 = vmatpush2.msra.mxu0 %v46
  %303 = vmatprep.subr.mxu0 0.0
  %304 = vmatpush2.msra.mxu0 %v45
  %305 = vmatprep.subr.mxu0 0.0
  %306 = vmatpush2.msra.mxu0 %v44
  %307 = vmatprep.subr.mxu0 0.0
  %308 = vmatpush2.msra.mxu0 %v43
  %309 = vmatprep.subr.mxu0 0.0
  %310 = vmatpush2.msra.mxu0 %v42
  %311 = vmatprep.subr.mxu0 0.0
  %312 = vmatpush2.msra.mxu0 %v41
  %313 = vmatprep.subr.mxu0 0.0
  %314 = vmatpush2.msra.mxu0 %v40
  %315 = vmatprep.subr.mxu0 0.0
  %316 = vmatpush2.msra.mxu0 %v39
  %317 = vmatprep.mubr.f32.mxu0 %v246
  %318 = vmatmul.mubr.f32.gmra.mxu0 %v245
  %v319 = vpop.f32.mrf.mxu0
  %v320 = vadd.f32 0.0, %v319
  %v321 = vpop.f32.mrf.mxu0
  %322 = vmatprep.mubr.f32.mxu0 %v248
  %323 = vmatmul.mubr.f32.gmra.mxu0 %v247
  %v324 = vpop.f32.mrf.mxu0
  %v325 = vadd.f32 0.0, %v324
  %v326 = vpop.f32.mrf.mxu0
  %327 = vmatprep.mubr.f32.mxu0 %v250
  %328 = vmatmul.mubr.f32.gmra.mxu0 %v249
  %v329 = vpop.f32.mrf.mxu0
  %v330 = vadd.f32 0.0, %v329
  %v331 = vpop.f32.mrf.mxu0
  %332 = vmatprep.mubr.f32.mxu0 %v252
  %333 = vmatmul.mubr.f32.gmra.mxu0 %v251
  %v334 = vpop.f32.mrf.mxu0
  %v335 = vadd.f32 0.0, %v334
  %v336 = vpop.f32.mrf.mxu0
  %337 = vdwg.mxu0
  %v338 = vld [vmem:[%s3] sm:$0xff]
  %v339 = vld [vmem:[%s3 + $0x8] sm:$0xff]
  %v340 = vld [vmem:[%s3 + $0x10] sm:$0xff]
  %v341 = vld [vmem:[%s3 + $0x18] sm:$0xff]
  %v342 = vld [vmem:[%s3 + $0x20] sm:$0xff]
  %v343 = vld [vmem:[%s3 + $0x28] sm:$0xff]
  %v344 = vld [vmem:[%s3 + $0x30] sm:$0xff]
  %v345 = vld [vmem:[%s3 + $0x38] sm:$0xff]
  %346 = vmatprep.subr.mxu0 0.0
  %347 = vmatpush1.msra.mxu0 %v38
  %348 = vmatprep.subr.mxu0 0.0
  %349 = vmatpush1.msra.mxu0 %v37
  %350 = vmatprep.subr.mxu0 0.0
  %351 = vmatpush1.msra.mxu0 %v36
  %352 = vmatprep.subr.mxu0 0.0
  %353 = vmatpush1.msra.mxu0 %v35
  %354 = vmatprep.subr.mxu0 0.0
  %355 = vmatpush1.msra.mxu0 %v34
  %356 = vmatprep.subr.mxu0 0.0
  %357 = vmatpush1.msra.mxu0 %v33
  %358 = vmatprep.subr.mxu0 0.0
  %359 = vmatpush1.msra.mxu0 %v32
  %360 = vmatprep.subr.mxu0 0.0
  %361 = vmatpush1.msra.mxu0 %v31
  %362 = vmatprep.subr.mxu0 0.0
  %363 = vmatpush1.msra.mxu0 %v30
  %364 = vmatprep.subr.mxu0 0.0
  %365 = vmatpush1.msra.mxu0 %v29
  %366 = vmatprep.subr.mxu0 0.0
  %367 = vmatpush1.msra.mxu0 %v28
  %368 = vmatprep.subr.mxu0 0.0
  %369 = vmatpush1.msra.mxu0 %v27
  %370 = vmatprep.subr.mxu0 0.0
  %371 = vmatpush1.msra.mxu0 %v26
  %372 = vmatprep.subr.mxu0 0.0
  %373 = vmatpush1.msra.mxu0 %v25
  %374 = vmatprep.subr.mxu0 0.0
  %375 = vmatpush1.msra.mxu0 %v24
  %376 = vmatprep.subr.mxu0 0.0
  %377 = vmatpush1.msra.mxu0 %v23
  %378 = vmatprep.subr.mxu0 0.0
  %379 = vmatpush2.msra.mxu0 %v54
  %380 = vmatprep.subr.mxu0 0.0
  %381 = vmatpush2.msra.mxu0 %v53
  %382 = vmatprep.subr.mxu0 0.0
  %383 = vmatpush2.msra.mxu0 %v52
  %384 = vmatprep.subr.mxu0 0.0
  %385 = vmatpush2.msra.mxu0 %v51
  %386 = vmatprep.subr.mxu0 0.0
  %387 = vmatpush2.msra.mxu0 %v50
  %388 = vmatprep.subr.mxu0 0.0
  %389 = vmatpush2.msra.mxu0 %v49
  %390 = vmatprep.subr.mxu0 0.0
  %391 = vmatpush2.msra.mxu0 %v48
  %392 = vmatprep.subr.mxu0 0.0
  %393 = vmatpush2.msra.mxu0 %v47
  %394 = vmatprep.subr.mxu0 0.0
  %395 = vmatpush2.msra.mxu0 %v46
  %396 = vmatprep.subr.mxu0 0.0
  %397 = vmatpush2.msra.mxu0 %v45
  %398 = vmatprep.subr.mxu0 0.0
  %399 = vmatpush2.msra.mxu0 %v44
  %400 = vmatprep.subr.mxu0 0.0
  %401 = vmatpush2.msra.mxu0 %v43
  %402 = vmatprep.subr.mxu0 0.0
  %403 = vmatpush2.msra.mxu0 %v42
  %404 = vmatprep.subr.mxu0 0.0
  %405 = vmatpush2.msra.mxu0 %v41
  %406 = vmatprep.subr.mxu0 0.0
  %407 = vmatpush2.msra.mxu0 %v40
  %408 = vmatprep.subr.mxu0 0.0
  %409 = vmatpush2.msra.mxu0 %v39
  %410 = vmatprep.mubr.f32.mxu0 %v339
  %411 = vmatmul.mubr.f32.gmra.mxu0 %v338
  %v412 = vpop.f32.mrf.mxu0
  %v413 = vadd.f32 0.0, %v412
  %v414 = vpop.f32.mrf.mxu0
  %415 = vmatprep.mubr.f32.mxu0 %v341
  %416 = vmatmul.mubr.f32.gmra.mxu0 %v340
  %v417 = vpop.f32.mrf.mxu0
  %v418 = vadd.f32 0.0, %v417
  %v419 = vpop.f32.mrf.mxu0
  %420 = vmatprep.mubr.f32.mxu0 %v343
  %421 = vmatmul.mubr.f32.gmra.mxu0 %v342
  %v422 = vpop.f32.mrf.mxu0
  %v423 = vadd.f32 0.0, %v422
  %v424 = vpop.f32.mrf.mxu0
  %425 = vmatprep.mubr.f32.mxu0 %v345
  %426 = vmatmul.mubr.f32.gmra.mxu0 %v344
  %v427 = vpop.f32.mrf.mxu0
  %v428 = vadd.f32 0.0, %v427
  %v429 = vpop.f32.mrf.mxu0
  %430 = vdwg.mxu0
  %v431 = vmax.f32 %v320, %v413
  %v432 = vmax.f32 %v325, %v418
  %v433 = vmax.f32 %v330, %v423
  %v434 = vmax.f32 %v335, %v428
  %v435 = vmax.f32 %v241, %v431
  %v436 = vmax.f32 %v242, %v432
  %v437 = vmax.f32 %v243, %v433
  %v438 = vmax.f32 %v244, %v434
  %v439 = vld [vmem:[%s5] sm:$0x1]
  %v441 = vlaneseq
  %v442 = vshrl.u32 %v441, 7
  %v443 = vsub.s32 0, %v442
  %v444 = vrot.slane %v439, %v443
  %v446 = vadd.f32 %v435, %v444
  %v447 = vadd.f32 %v436, %v444
  %v448 = vadd.f32 %v437, %v444
  %v449 = vadd.f32 %v438, %v444
  %v450 = vmax.f32 %v446, 0.0
  %v451 = vmax.f32 %v447, 0.0
  %v452 = vmax.f32 %v448, 0.0
  %v453 = vmax.f32 %v449, 0.0
  %vm454 = vcmask 162816
  %455 = vst.msk [vmem:[%s6] sm:$0xff] %vm454, %v450
  %456 = vst.msk [vmem:[%s6 + $0x8] sm:$0xff] %vm454, %v451
  %457 = vst.msk [vmem:[%s6 + $0x10] sm:$0xff] %vm454, %v452
  %458 = vst.msk [vmem:[%s6 + $0x18] sm:$0xff] %vm454, %v453
  // Predicated region
  $region26: #{mnist_forward.4} parent=0 // pred_check
    _
  $region27: #{mnist_forward.4} parent=0 // pred_check_branch
    %460 = sbr.rel (0) target = $region29
  $region28: #{mnist_forward.4} parent=0 // pred_region
    _
  $region29: #{mnist_forward.4} parent=0 // pred_fallthru
    _
  // Predicated region
  $region30: #{mnist_forward.4} parent=0 // pred_check
    _
  $region31: #{mnist_forward.4} parent=0 // pred_check_branch
    %462 = sbr.rel (0) target = $region33
  $region32: #{mnist_forward.4} parent=0 // pred_region
    _
  $region33: #{mnist_forward.4} parent=0 // pred_fallthru
    _

// kernel: mnist_forward.5
$region0: #{mnist_forward.5}
  #allocation0 [shape = 'u32[]', space=smem, size = 0x4, offset = 0x4, fixed_abs, tag = 'smem constant byte address 0x4 - core index']
  #allocation1 [shape = 'u32[144,128]{1,0:T(1,128)}', space=vmem, size = 0x12000, scoped, tag = 'internal scratch']
  %s0 = inlined_call_operand.vmem [shape: f32[2,320], index: 0, kind: input, shape index: {}]
  %s1 = inlined_call_operand.vmem [shape: f32[320,150], index: 1, kind: input, shape index: {}]
  %s2 = inlined_call_operand.vmem [shape: f32[1,150], index: 2, kind: input, shape index: {}]
  %s3 = inlined_call_operand.vmem [shape: f32[150,50], index: 3, kind: input, shape index: {}]
  %s4 = inlined_call_operand.vmem [shape: f32[1,50], index: 4, kind: input, shape index: {}]
  %s5 = inlined_call_operand.vmem [shape: f32[50,10], index: 5, kind: input, shape index: {}]
  %s6 = inlined_call_operand.vmem [shape: f32[1,10], index: 6, kind: input, shape index: {}]
  %s7 = inlined_call_operand.hbm [shape: f32[2,10], index: 7, kind: output, shape index: {}]
  %s8 = sld [smem:[#allocation0]]
  $region38: #{mnist_forward.5} parent=0
    _
  %s10 = ssub.s32 1, %s8
  %s11 = scalar_select 0, %s10, %s8
  $region1: #{mnist_forward.5} parent=0
    #allocation2 [shape = 'u8[1024]{0}', space=vmem, size = 0x400, scoped, tag = 'output window, operand 0, single buffered']
    #allocation3 [shape = 's32[1]{0}', space=sflag, size = 0x4, scoped, tag = 'scoped memory for mnist_forward.5']
    %12 = vsyncpa [#allocation3], 0
    // Predicated region
    $region2: #{mnist_forward.5} parent=1 // pred_check
      _
    $region3: #{mnist_forward.5} parent=1 // pred_check_branch
      %14 = sbr.rel (0) target = $region5
    $region4: #{mnist_forward.5} parent=1 // pred_region
      _
    $region5: #{mnist_forward.5} parent=1 // pred_fallthru
      _
    // Predicated region
    $region6: #{mnist_forward.5} parent=1 // pred_check
      _
    $region7: #{mnist_forward.5} parent=1 // pred_check_branch
      %16 = sbr.rel (0) target = $region9
    $region8: #{mnist_forward.5} parent=1 // pred_region
      _
    $region9: #{mnist_forward.5} parent=1 // pred_fallthru
      _
    // Predicated region
    $region10: #{mnist_forward.5} parent=1 // pred_check
      _
    $region11: #{mnist_forward.5} parent=1 // pred_check_branch
      %18 = sbr.rel (0) target = $region13
    $region12: #{mnist_forward.5} parent=1 // pred_region
      _
    $region13: #{mnist_forward.5} parent=1 // pred_fallthru
      _
    // Predicated region
    $region14: #{mnist_forward.5} parent=1 // pred_check
      _
    $region15: #{mnist_forward.5} parent=1 // pred_check_branch
      %20 = sbr.rel (0) target = $region17
    $region16: #{mnist_forward.5} parent=1 // pred_region
      _
    $region17: #{mnist_forward.5} parent=1 // pred_fallthru
      _
    // Predicated region
    $region18: #{mnist_forward.5} parent=1 // pred_check
      _
    $region19: #{mnist_forward.5} parent=1 // pred_check_branch
      %22 = sbr.rel (0) target = $region21
    $region20: #{mnist_forward.5} parent=1 // pred_region
      _
    $region21: #{mnist_forward.5} parent=1 // pred_fallthru
      _
    // Predicated region
    $region22: #{mnist_forward.5} parent=1 // pred_check
      _
    $region23: #{mnist_forward.5} parent=1 // pred_check_branch
      %24 = sbr.rel (0) target = $region25
    $region24: #{mnist_forward.5} parent=1 // pred_region
      _
    $region25: #{mnist_forward.5} parent=1 // pred_fallthru
      _
    // Predicated region
    $region26: #{mnist_forward.5} parent=1 // pred_check
      _
    $region27: #{mnist_forward.5} parent=1 // pred_check_branch
      %26 = sbr.rel (0) target = $region29
    $region28: #{mnist_forward.5} parent=1 // pred_region
      _
    $region29: #{mnist_forward.5} parent=1 // pred_fallthru
      _
    %v27 = vld [vmem:[%s0] sm:$0x3f]
    %v28 = vld [vmem:[%s1] sm:$0xff]
    %v29 = vld [vmem:[%s1 + $0x8] sm:$0xff]
    %v30 = vld [vmem:[%s1 + $0x10] sm:$0xff]
    %v31 = vld [vmem:[%s1 + $0x18] sm:$0xff]
    %v32 = vld [vmem:[%s1 + $0x20] sm:$0xff]
    %v33 = vld [vmem:[%s1 + $0x28] sm:$0xff]
    %v34 = vld [vmem:[%s1 + $0x30] sm:$0xff]
    %v35 = vld [vmem:[%s1 + $0x38] sm:$0xff]
    %v36 = vld [vmem:[%s1 + $0x40] sm:$0xff]
    %v37 = vld [vmem:[%s1 + $0x48] sm:$0xff]
    %v38 = vld [vmem:[%s1 + $0x50] sm:$0xff]
    %v39 = vld [vmem:[%s1 + $0x58] sm:$0xff]
    %v40 = vld [vmem:[%s1 + $0x60] sm:$0xff]
    %v41 = vld [vmem:[%s1 + $0x68] sm:$0xff]
    %v42 = vld [vmem:[%s1 + $0x70] sm:$0xff]
    %v43 = vld [vmem:[%s1 + $0x78] sm:$0xff]
    %v44 = vld [vmem:[%s1 + $0x80] sm:$0xff]
    %v45 = vld [vmem:[%s1 + $0x88] sm:$0xff]
    %v46 = vld [vmem:[%s1 + $0x90] sm:$0xff]
    %v47 = vld [vmem:[%s1 + $0x98] sm:$0xff]
    %v48 = vld [vmem:[%s1 + $0xa0] sm:$0xff]
    %v49 = vld [vmem:[%s1 + $0xa8] sm:$0xff]
    %v50 = vld [vmem:[%s1 + $0xb0] sm:$0xff]
    %v51 = vld [vmem:[%s1 + $0xb8] sm:$0xff]
    %v52 = vld [vmem:[%s1 + $0xc0] sm:$0xff]
    %v53 = vld [vmem:[%s1 + $0xc8] sm:$0xff]
    %v54 = vld [vmem:[%s1 + $0xd0] sm:$0xff]
    %v55 = vld [vmem:[%s1 + $0xd8] sm:$0xff]
    %v56 = vld [vmem:[%s1 + $0xe0] sm:$0xff]
    %v57 = vld [vmem:[%s1 + $0xe8] sm:$0xff]
    %v58 = vld [vmem:[%s1 + $0xf0] sm:$0xff]
    %v59 = vld [vmem:[%s1 + $0xf8] sm:$0xff]
    %v60 = vld [vmem:[%s1 + $0x100] sm:$0xff]
    %v61 = vld [vmem:[%s1 + $0x108] sm:$0xff]
    %v62 = vld [vmem:[%s1 + $0x110] sm:$0xff]
    %v63 = vld [vmem:[%s1 + $0x118] sm:$0xff]
    %v64 = vld [vmem:[%s1 + $0x120] sm:$0xff]
    %v65 = vld [vmem:[%s1 + $0x128] sm:$0xff]
    %v66 = vld [vmem:[%s1 + $0x130] sm:$0xff]
    %v67 = vld [vmem:[%s1 + $0x138] sm:$0xff]
    %v68 = vld [vmem:[%s1 + $0x140] sm:$0xff]
    %v69 = vld [vmem:[%s1 + $0x148] sm:$0xff]
    %v70 = vld [vmem:[%s1 + $0x150] sm:$0xff]
    %v71 = vld [vmem:[%s1 + $0x158] sm:$0xff]
    %v72 = vld [vmem:[%s1 + $0x160] sm:$0xff]
    %v73 = vld [vmem:[%s1 + $0x168] sm:$0xff]
    %v74 = vld [vmem:[%s1 + $0x170] sm:$0xff]
    %v75 = vld [vmem:[%s1 + $0x178] sm:$0xff]
    %v76 = vld [vmem:[%s1 + $0x180] sm:$0xff]
    %v77 = vld [vmem:[%s1 + $0x188] sm:$0xff]
    %v78 = vld [vmem:[%s1 + $0x190] sm:$0xff]
    %v79 = vld [vmem:[%s1 + $0x198] sm:$0xff]
    %v80 = vld [vmem:[%s1 + $0x1a0] sm:$0xff]
    %v81 = vld [vmem:[%s1 + $0x1a8] sm:$0xff]
    %v82 = vld [vmem:[%s1 + $0x1b0] sm:$0xff]
    %v83 = vld [vmem:[%s1 + $0x1b8] sm:$0xff]
    %v84 = vld [vmem:[%s1 + $0x1c0] sm:$0xff]
    %v85 = vld [vmem:[%s1 + $0x1c8] sm:$0xff]
    %v86 = vld [vmem:[%s1 + $0x1d0] sm:$0xff]
    %v87 = vld [vmem:[%s1 + $0x1d8] sm:$0xff]
    %v88 = vld [vmem:[%s1 + $0x1e0] sm:$0xff]
    %v89 = vld [vmem:[%s1 + $0x1e8] sm:$0xff]
    %v90 = vld [vmem:[%s1 + $0x1f0] sm:$0xff]
    %v91 = vld [vmem:[%s1 + $0x1f8] sm:$0xff]
    %v92 = vld [vmem:[%s1 + $0x200] sm:$0xff]
    %v93 = vld [vmem:[%s1 + $0x208] sm:$0xff]
    %v94 = vld [vmem:[%s1 + $0x210] sm:$0xff]
    %v95 = vld [vmem:[%s1 + $0x218] sm:$0xff]
    %v96 = vld [vmem:[%s1 + $0x220] sm:$0xff]
    %v97 = vld [vmem:[%s1 + $0x228] sm:$0xff]
    %v98 = vld [vmem:[%s1 + $0x230] sm:$0xff]
    %v99 = vld [vmem:[%s1 + $0x238] sm:$0xff]
    %v100 = vld [vmem:[%s1 + $0x240] sm:$0xff]
    %v101 = vld [vmem:[%s1 + $0x248] sm:$0xff]
    %v102 = vld [vmem:[%s1 + $0x250] sm:$0xff]
    %v103 = vld [vmem:[%s1 + $0x258] sm:$0xff]
    %v104 = vld [vmem:[%s1 + $0x260] sm:$0xff]
    %v105 = vld [vmem:[%s1 + $0x268] sm:$0xff]
    %v106 = vld [vmem:[%s1 + $0x270] sm:$0xff]
    %v107 = vld [vmem:[%s1 + $0x278] sm:$0xff]
    %v108 = vld [vmem:[%s2] sm:$0x3]
    %v110 = vlaneseq
    %v111 = vshrl.u32 %v110, 7
    %v112 = vsub.s32 0, %v111
    %v113 = vrot.slane %v108, %v112
    %v114 = vlaneseq
    %v115 = vshrl.u32 %v114, 7
    %v116 = vsub.s32 1, %v115
    %v117 = vrot.slane %v108, %v116
    %v121 = vcombine.high %v27, %v27
    %v123 = vunpack.c.l.s4 1983009808
    %v124 = vunpack.c.0.s8 %v123
    %v125 = vlaneseq
    %v126 = vshrl.u32 %v125, 7
    %v127 = vsub.s32 %v124, %v126
    %v128 = vrot.slane %v27, %v127
    %v130 = vunpack.c.l.s4 1983009808
    %v131 = vunpack.c.0.s8 %v130
    %v132 = vlaneseq
    %v133 = vshrl.u32 %v132, 7
    %v134 = vsub.s32 %v131, %v133
    %v135 = vrot.slane %v121, %v134
    %v136 = vcombine.high %v128, %v128
    %vm139 = vcmask 523264
    %v140 = vsel %vm139, %v135, 0
    %142 = vmatprep.subr.mxu0 %v59
    %143 = vmatpush1.msra.mxu0 %v58
    %144 = vmatprep.subr.mxu0 %v57
    %145 = vmatpush1.msra.mxu0 %v56
    %146 = vmatprep.subr.mxu0 %v55
    %147 = vmatpush1.msra.mxu0 %v54
    %148 = vmatprep.subr.mxu0 %v53
    %149 = vmatpush1.msra.mxu0 %v52
    %150 = vmatprep.subr.mxu0 %v51
    %151 = vmatpush1.msra.mxu0 %v50
    %152 = vmatprep.subr.mxu0 %v49
    %153 = vmatpush1.msra.mxu0 %v48
    %154 = vmatprep.subr.mxu0 %v47
    %155 = vmatpush1.msra.mxu0 %v46
    %156 = vmatprep.subr.mxu0 %v45
    %157 = vmatpush1.msra.mxu0 %v44
    %158 = vmatprep.subr.mxu0 %v43
    %159 = vmatpush1.msra.mxu0 %v42
    %160 = vmatprep.subr.mxu0 %v41
    %161 = vmatpush1.msra.mxu0 %v40
    %162 = vmatprep.subr.mxu0 %v39
    %163 = vmatpush1.msra.mxu0 %v38
    %164 = vmatprep.subr.mxu0 %v37
    %165 = vmatpush1.msra.mxu0 %v36
    %166 = vmatprep.subr.mxu0 %v35
    %167 = vmatpush1.msra.mxu0 %v34
    %168 = vmatprep.subr.mxu0 %v33
    %169 = vmatpush1.msra.mxu0 %v32
    %170 = vmatprep.subr.mxu0 %v31
    %171 = vmatpush1.msra.mxu0 %v30
    %172 = vmatprep.subr.mxu0 %v29
    %173 = vmatpush1.msra.mxu0 %v28
    %174 = vmatprep.subr.mxu0 %v91
    %175 = vmatpush2.msra.mxu0 %v90
    %176 = vmatprep.subr.mxu0 %v89
    %177 = vmatpush2.msra.mxu0 %v88
    %178 = vmatprep.subr.mxu0 %v87
    %179 = vmatpush2.msra.mxu0 %v86
    %180 = vmatprep.subr.mxu0 %v85
    %181 = vmatpush2.msra.mxu0 %v84
    %182 = vmatprep.subr.mxu0 %v83
    %183 = vmatpush2.msra.mxu0 %v82
    %184 = vmatprep.subr.mxu0 %v81
    %185 = vmatpush2.msra.mxu0 %v80
    %186 = vmatprep.subr.mxu0 %v79
    %187 = vmatpush2.msra.mxu0 %v78
    %188 = vmatprep.subr.mxu0 %v77
    %189 = vmatpush2.msra.mxu0 %v76
    %190 = vmatprep.subr.mxu0 %v75
    %191 = vmatpush2.msra.mxu0 %v74
    %192 = vmatprep.subr.mxu0 %v73
    %193 = vmatpush2.msra.mxu0 %v72
    %194 = vmatprep.subr.mxu0 %v71
    %195 = vmatpush2.msra.mxu0 %v70
    %196 = vmatprep.subr.mxu0 %v69
    %197 = vmatpush2.msra.mxu0 %v68
    %198 = vmatprep.subr.mxu0 %v67
    %199 = vmatpush2.msra.mxu0 %v66
    %200 = vmatprep.subr.mxu0 %v65
    %201 = vmatpush2.msra.mxu0 %v64
    %202 = vmatprep.subr.mxu0 %v63
    %203 = vmatpush2.msra.mxu0 %v62
    %204 = vmatprep.subr.mxu0 %v61
    %205 = vmatpush2.msra.mxu0 %v60
    %206 = vmatprep.mubr.f32.mxu0 %v136
    %207 = vmatmul.mubr.f32.gmra.mxu0 %v128
    %v208 = vpop.f32.mrf.mxu0
    %v209 = vadd.f32 %v113, %v208
    %v210 = vpop.f32.mrf.mxu0
    %v211 = vadd.f32 %v117, %v210
    %212 = vdwg.mxu0
    %213 = vmatprep.subr.mxu0 0.0
    %214 = vmatpush1.msra.mxu0 0.0
    %215 = vmatprep.subr.mxu0 0.0
    %216 = vmatpush1.msra.mxu0 0.0
    %217 = vmatprep.subr.mxu0 0.0
    %218 = vmatpush1.msra.mxu0 0.0
    %219 = vmatprep.subr.mxu0 0.0
    %220 = vmatpush1.msra.mxu0 0.0
    %221 = vmatprep.subr.mxu0 0.0
    %222 = vmatpush1.msra.mxu0 0.0
    %223 = vmatprep.subr.mxu0 0.0
    %224 = vmatpush1.msra.mxu0 0.0
    %225 = vmatprep.subr.mxu0 0.0
    %226 = vmatpush1.msra.mxu0 0.0
    %227 = vmatprep.subr.mxu0 0.0
    %228 = vmatpush1.msra.mxu0 0.0
    %229 = vmatprep.subr.mxu0 %v107
    %230 = vmatpush1.msra.mxu0 %v106
    %231 = vmatprep.subr.mxu0 %v105
    %232 = vmatpush1.msra.mxu0 %v104
    %233 = vmatprep.subr.mxu0 %v103
    %234 = vmatpush1.msra.mxu0 %v102
    %235 = vmatprep.subr.mxu0 %v101
    %236 = vmatpush1.msra.mxu0 %v100
    %237 = vmatprep.subr.mxu0 %v99
    %238 = vmatpush1.msra.mxu0 %v98
    %239 = vmatprep.subr.mxu0 %v97
    %240 = vmatpush1.msra.mxu0 %v96
    %241 = vmatprep.subr.mxu0 %v95
    %242 = vmatpush1.msra.mxu0 %v94
    %243 = vmatprep.subr.mxu0 %v93
    %244 = vmatpush1.msra.mxu0 %v92
    %245 = vmatprep.subr.mxu0 0.0
    %246 = vmatpush2.msra.mxu0 0.0
    %247 = vmatprep.subr.mxu0 0.0
    %248 = vmatpush2.msra.mxu0 0.0
    %249 = vmatprep.subr.mxu0 0.0
    %250 = vmatpush2.msra.mxu0 0.0
    %251 = vmatprep.subr.mxu0 0.0
    %252 = vmatpush2.msra.mxu0 0.0
    %253 = vmatprep.subr.mxu0 0.0
    %254 = vmatpush2.msra.mxu0 0.0
    %255 = vmatprep.subr.mxu0 0.0
    %256 = vmatpush2.msra.mxu0 0.0
    %257 = vmatprep.subr.mxu0 0.0
    %258 = vmatpush2.msra.mxu0 0.0
    %259 = vmatprep.subr.mxu0 0.0
    %260 = vmatpush2.msra.mxu0 0.0
    %261 = vmatprep.subr.mxu0 0.0
    %262 = vmatpush2.msra.mxu0 0.0
    %263 = vmatprep.subr.mxu0 0.0
    %264 = vmatpush2.msra.mxu0 0.0
    %265 = vmatprep.subr.mxu0 0.0
    %266 = vmatpush2.msra.mxu0 0.0
    %267 = vmatprep.subr.mxu0 0.0
    %268 = vmatpush2.msra.mxu0 0.0
    %269 = vmatprep.subr.mxu0 0.0
    %270 = vmatpush2.msra.mxu0 0.0
    %271 = vmatprep.subr.mxu0 0.0
    %272 = vmatpush2.msra.mxu0 0.0
    %273 = vmatprep.subr.mxu0 0.0
    %274 = vmatpush2.msra.mxu0 0.0
    %275 = vmatprep.subr.mxu0 0.0
    %276 = vmatpush2.msra.mxu0 0.0
    %277 = vmatprep.mubr.f32.mxu0 0.0
    %278 = vmatmul.mubr.f32.gmra.mxu0 %v140
    %v279 = vpop.f32.mrf.mxu0
    %v280 = vadd.f32 %v209, %v279
    %v281 = vpop.f32.mrf.mxu0
    %v282 = vadd.f32 %v211, %v281
    %283 = vdwg.mxu0
    %v284 = vmax.f32 %v280, 0.0
    %v285 = vmax.f32 %v282, 0.0
    %v286 = vld [vmem:[%s3] sm:$0xff]
    %v287 = vld [vmem:[%s3 + $0x8] sm:$0xff]
    %v288 = vld [vmem:[%s3 + $0x10] sm:$0xff]
    %v289 = vld [vmem:[%s3 + $0x18] sm:$0xff]
    %v290 = vld [vmem:[%s3 + $0x20] sm:$0xff]
    %v291 = vld [vmem:[%s3 + $0x28] sm:$0xff]
    %v292 = vld [vmem:[%s3 + $0x30] sm:$0xff]
    %v293 = vld [vmem:[%s3 + $0x38] sm:$0xff]
    %v294 = vld [vmem:[%s3 + $0x40] sm:$0xff]
    %v295 = vld [vmem:[%s3 + $0x48] sm:$0xff]
    %v296 = vld [vmem:[%s3 + $0x50] sm:$0xff]
    %v297 = vld [vmem:[%s3 + $0x58] sm:$0xff]
    %v298 = vld [vmem:[%s3 + $0x60] sm:$0xff]
    %v299 = vld [vmem:[%s3 + $0x68] sm:$0xff]
    %v300 = vld [vmem:[%s3 + $0x70] sm:$0xff]
    %v301 = vld [vmem:[%s3 + $0x78] sm:$0xff]
    %v302 = vld [vmem:[%s3 + $0x80] sm:$0xff]
    %v303 = vld [vmem:[%s3 + $0x88] sm:$0xff]
    %v304 = vld [vmem:[%s3 + $0x90] sm:$0x3f]
    %v305 = vld [vmem:[%s4] sm:$0x1]
    %v307 = vlaneseq
    %v308 = vshrl.u32 %v307, 7
    %v309 = vsub.s32 0, %v308
    %v310 = vrot.slane %v305, %v309
    %vm312 = vcmask 179200
    %v314 = vsel %vm312, %v285, 0
    %vm316 = vcmask 1045504
    %v318 = vsel %vm316, %v304, 0
    %320 = vmatprep.subr.mxu0 0.0
    %321 = vmatpush1.msra.mxu0 %v301
    %322 = vmatprep.subr.mxu0 0.0
    %323 = vmatpush1.msra.mxu0 %v300
    %324 = vmatprep.subr.mxu0 0.0
    %325 = vmatpush1.msra.mxu0 %v299
    %326 = vmatprep.subr.mxu0 0.0
    %327 = vmatpush1.msra.mxu0 %v298
    %328 = vmatprep.subr.mxu0 0.0
    %329 = vmatpush1.msra.mxu0 %v297
    %330 = vmatprep.subr.mxu0 0.0
    %331 = vmatpush1.msra.mxu0 %v296
    %332 = vmatprep.subr.mxu0 0.0
    %333 = vmatpush1.msra.mxu0 %v295
    %334 = vmatprep.subr.mxu0 0.0
    %335 = vmatpush1.msra.mxu0 %v294
    %336 = vmatprep.subr.mxu0 0.0
    %337 = vmatpush1.msra.mxu0 %v293
    %338 = vmatprep.subr.mxu0 0.0
    %339 = vmatpush1.msra.mxu0 %v292
    %340 = vmatprep.subr.mxu0 0.0
    %341 = vmatpush1.msra.mxu0 %v291
    %342 = vmatprep.subr.mxu0 0.0
    %343 = vmatpush1.msra.mxu0 %v290
    %344 = vmatprep.subr.mxu0 0.0
    %345 = vmatpush1.msra.mxu0 %v289
    %346 = vmatprep.subr.mxu0 0.0
    %347 = vmatpush1.msra.mxu0 %v288
    %348 = vmatprep.subr.mxu0 0.0
    %349 = vmatpush1.msra.mxu0 %v287
    %350 = vmatprep.subr.mxu0 0.0
    %351 = vmatpush1.msra.mxu0 %v286
    %352 = vmatprep.subr.mxu0 0.0
    %353 = vmatpush2.msra.mxu0 0.0
    %354 = vmatprep.subr.mxu0 0.0
    %355 = vmatpush2.msra.mxu0 0.0
    %356 = vmatprep.subr.mxu0 0.0
    %357 = vmatpush2.msra.mxu0 0.0
    %358 = vmatprep.subr.mxu0 0.0
    %359 = vmatpush2.msra.mxu0 0.0
    %360 = vmatprep.subr.mxu0 0.0
    %361 = vmatpush2.msra.mxu0 0.0
    %362 = vmatprep.subr.mxu0 0.0
    %363 = vmatpush2.msra.mxu0 0.0
    %364 = vmatprep.subr.mxu0 0.0
    %365 = vmatpush2.msra.mxu0 0.0
    %366 = vmatprep.subr.mxu0 0.0
    %367 = vmatpush2.msra.mxu0 0.0
    %368 = vmatprep.subr.mxu0 0.0
    %369 = vmatpush2.msra.mxu0 0.0
    %370 = vmatprep.subr.mxu0 0.0
    %371 = vmatpush2.msra.mxu0 0.0
    %372 = vmatprep.subr.mxu0 0.0
    %373 = vmatpush2.msra.mxu0 0.0
    %374 = vmatprep.subr.mxu0 0.0
    %375 = vmatpush2.msra.mxu0 0.0
    %376 = vmatprep.subr.mxu0 0.0
    %377 = vmatpush2.msra.mxu0 0.0
    %378 = vmatprep.subr.mxu0 0.0
    %379 = vmatpush2.msra.mxu0 %v318
    %380 = vmatprep.subr.mxu0 0.0
    %381 = vmatpush2.msra.mxu0 %v303
    %382 = vmatprep.subr.mxu0 0.0
    %383 = vmatpush2.msra.mxu0 %v302
    %384 = vmatprep.mubr.f32.mxu0 %v314
    %385 = vmatmul.mubr.f32.gmra.mxu0 %v284
    %v386 = vpop.f32.mrf.mxu0
    %v387 = vadd.f32 %v310, %v386
    %v388 = vpop.f32.mrf.mxu0
    %389 = vdwg.mxu0
    %v390 = vmax.f32 %v387, 0.0
    %v391 = vld [vmem:[%s5] sm:$0xff]
    %v392 = vld [vmem:[%s5 + $0x8] sm:$0xff]
    %v393 = vld [vmem:[%s5 + $0x10] sm:$0xff]
    %v394 = vld [vmem:[%s5 + $0x18] sm:$0xff]
    %v395 = vld [vmem:[%s5 + $0x20] sm:$0xff]
    %v396 = vld [vmem:[%s5 + $0x28] sm:$0xff]
    %v397 = vld [vmem:[%s5 + $0x30] sm:$0x3]
    %v398 = vld [vmem:[%s6] sm:$0x1]
    %v400 = vlaneseq
    %v401 = vshrl.u32 %v400, 7
    %v402 = vsub.s32 0, %v401
    %v403 = vrot.slane %v398, %v402
    %vm405 = vcmask 408576
    %v407 = vsel %vm405, %v390, 0
    %vm409 = vcmask 1041408
    %v411 = vsel %vm409, %v397, 0
    %413 = vmatprep.subr.mxu0 0.0
    %414 = vmatpush1.msra.mxu0 0.0
    %415 = vmatprep.subr.mxu0 0.0
    %416 = vmatpush1.msra.mxu0 0.0
    %417 = vmatprep.subr.mxu0 0.0
    %418 = vmatpush1.msra.mxu0 0.0
    %419 = vmatprep.subr.mxu0 0.0
    %420 = vmatpush1.msra.mxu0 0.0
    %421 = vmatprep.subr.mxu0 0.0
    %422 = vmatpush1.msra.mxu0 0.0
    %423 = vmatprep.subr.mxu0 0.0
    %424 = vmatpush1.msra.mxu0 0.0
    %425 = vmatprep.subr.mxu0 0.0
    %426 = vmatpush1.msra.mxu0 0.0
    %427 = vmatprep.subr.mxu0 0.0
    %428 = vmatpush1.msra.mxu0 0.0
    %429 = vmatprep.subr.mxu0 0.0
    %430 = vmatpush1.msra.mxu0 0.0
    %431 = vmatprep.subr.mxu0 0.0
    %432 = vmatpush1.msra.mxu0 %v411
    %433 = vmatprep.subr.mxu0 0.0
    %434 = vmatpush1.msra.mxu0 %v396
    %435 = vmatprep.subr.mxu0 0.0
    %436 = vmatpush1.msra.mxu0 %v395
    %437 = vmatprep.subr.mxu0 0.0
    %438 = vmatpush1.msra.mxu0 %v394
    %439 = vmatprep.subr.mxu0 0.0
    %440 = vmatpush1.msra.mxu0 %v393
    %441 = vmatprep.subr.mxu0 0.0
    %442 = vmatpush1.msra.mxu0 %v392
    %443 = vmatprep.subr.mxu0 0.0
    %444 = vmatpush1.msra.mxu0 %v391
    %445 = vmatprep.subr.mxu0 0.0
    %446 = vmatpush2.msra.mxu0 0.0
    %447 = vmatprep.subr.mxu0 0.0
    %448 = vmatpush2.msra.mxu0 0.0
    %449 = vmatprep.subr.mxu0 0.0
    %450 = vmatpush2.msra.mxu0 0.0
    %451 = vmatprep.subr.mxu0 0.0
    %452 = vmatpush2.msra.mxu0 0.0
    %453 = vmatprep.subr.mxu0 0.0
    %454 = vmatpush2.msra.mxu0 0.0
    %455 = vmatprep.subr.mxu0 0.0
    %456 = vmatpush2.msra.mxu0 0.0
    %457 = vmatprep.subr.mxu0 0.0
    %458 = vmatpush2.msra.mxu0 0.0
    %459 = vmatprep.subr.mxu0 0.0
    %460 = vmatpush2.msra.mxu0 0.0
    %461 = vmatprep.subr.mxu0 0.0
    %462 = vmatpush2.msra.mxu0 0.0
    %463 = vmatprep.subr.mxu0 0.0
    %464 = vmatpush2.msra.mxu0 0.0
    %465 = vmatprep.subr.mxu0 0.0
    %466 = vmatpush2.msra.mxu0 0.0
    %467 = vmatprep.subr.mxu0 0.0
    %468 = vmatpush2.msra.mxu0 0.0
    %469 = vmatprep.subr.mxu0 0.0
    %470 = vmatpush2.msra.mxu0 0.0
    %471 = vmatprep.subr.mxu0 0.0
    %472 = vmatpush2.msra.mxu0 0.0
    %473 = vmatprep.subr.mxu0 0.0
    %474 = vmatpush2.msra.mxu0 0.0
    %475 = vmatprep.subr.mxu0 0.0
    %476 = vmatpush2.msra.mxu0 0.0
    %477 = vmatprep.mubr.f32.mxu0 0.0
    %478 = vmatmul.mubr.f32.gmra.mxu0 %v407
    %v479 = vpop.f32.mrf.mxu0
    %v480 = vadd.f32 %v403, %v479
    %v481 = vpop.f32.mrf.mxu0
    %482 = vdwg.mxu0
    %vm483 = vcmask 74752
    %v484 = vsel %vm483, %v480, -inf
    %485 = vmax.xlane.f32.xlu0 %v484
    %v486 = vpop.xlane.xlu0 %485
    %v487 = vsub.f32 %v480, %v486
    %v488 = vmul.f32 %v487, 1.442695
    %v489 = vpow.pop %v488
    %v490 = vsel %vm483, %v489, 0.0
    %491 = vadd.xlane.f32.xlu0 %v490
    %v492 = vpop.xlane.xlu0 %491
    %v493 = vlog2.pop %v492
    %v494 = vmul.f32 %v493, 0.6931472
    %v495 = vsub.f32 %v487, %v494
    %496 = vst.msk [vmem:[#allocation2] sm:$0x3] %vm483, %v495
    // Predicated region
    $region30: #{mnist_forward.5} parent=1 // pred_check
      _
    $region31: #{mnist_forward.5} parent=1 // pred_check_branch
      %498 = sbr.rel (0) target = $region33
    $region32: #{mnist_forward.5} parent=1 // pred_region
      %s500 = ssub.s32 32, 32
      %501 = vsyncadd [#allocation3], %s500
      %s503 = sshll.u32 [#allocation2], 4
      %s504 = int_to_ptr.vmem [resolvable:$true] %s503
      %506 = dma.vmem_to_hbm [thread:$0]  %s504, 32, %s7, [#allocation3]
    $region33: #{mnist_forward.5} parent=1 // pred_fallthru
      _
    // Predicated region
    $region34: #{mnist_forward.5} parent=1 // pred_check
      _
    $region35: #{mnist_forward.5} parent=1 // pred_check_branch
      %508 = sbr.rel (0) target = $region37
    $region36: #{mnist_forward.5} parent=1 // pred_region
      %509 = dma.done [#allocation3], 32
    $region37: #{mnist_forward.5} parent=1 // pred_fallthru
      _
    %510 = vsyncpa [#allocation3], 1

</llo_original>
